<compile_context>
chip_gen: v6e
topology: v6e:2x2x1
jax: 0.10.0
libtpu: 0.0.40
codegen_flags: <defaults>
</compile_context>

<pallas_src>
import functools

import jax
import jax.numpy as jnp
from jax.experimental import pallas as pl
from jax.experimental.pallas import tpu as pltpu


def _round_up(x, m):
    return ((x + m - 1) // m) * m


def _make_kernel(tv, feat_resident):
    def kernel(w_ref, feat_ref, out_ref, den_ref):
        k = pl.program_id(1)

        @pl.when(k == 0)
        def _init():
            out_ref[...] = jnp.zeros_like(out_ref)
            den_ref[...] = jnp.zeros_like(den_ref)

        w = w_ref[...]                                    # (tb, tv), compute dtype

        if feat_resident:
            # Whole (V_pad, D_pad) feature matrix lives in VMEM; slice the current k tile.
            f = feat_ref[pl.ds(pl.multiple_of(k * tv, tv), tv), :]
        else:
            f = feat_ref[...]                             # streamed (tv, D_pad) tile

        # Numerator: accumulate directly into the resident f32 output block.
        out_ref[...] += jnp.dot(w, f, preferred_element_type=jnp.float32)
        # Denominator (num_neigh row sums), accumulated in f32.
        den_ref[...] += jnp.sum(w.astype(jnp.float32), axis=-1, keepdims=True)

        @pl.when(k == pl.num_programs(1) - 1)
        def _finalize():
            den = den_ref[...]
            # Guard den == 0 (padded rows); the original module would produce NaN here.
            inv = pl.reciprocal(jnp.where(den > 0.0, den, 1.0), approx=False)
            out_ref[...] = out_ref[...] * inv

    return kernel


@functools.partial(jax.jit, static_argnames=("tb", "tv", "compute_dtype",
                                             "feat_vmem_budget", "agg"))
def mean_aggregate(nodes, adj, feat_sims, feat, *, tb=256, tv=2048,
                   compute_dtype=jnp.bfloat16,
                   feat_vmem_budget=32 * 1024 * 1024, agg=True):
    """Forward pass of MeanAggregator (num_sample=None path)."""
    if not agg:
        return feat[nodes]

    B = nodes.shape[0]
    V, D = feat.shape
    assert adj.shape == (V, V) and feat_sims.shape == (V, V)

    # ---- fused gather + membership mask + add: one (B, V) weight stream ----
    adj_rows = adj[nodes].astype(jnp.float32)
    sims_rows = feat_sims[nodes].astype(jnp.float32)
    member = jnp.logical_or(
        adj_rows > 0.0,
        jnp.arange(V, dtype=nodes.dtype)[None, :] == nodes[:, None])   # self column
    w = jnp.where(member, adj_rows + sims_rows, 0.0).astype(compute_dtype)

    # Cast feat once to the MXU feed dtype (no per-tile re-cast inside the kernel).
    feat_c = feat.astype(compute_dtype)

    # ---- tile sizes & padding (lane-dense, (8,128)-aligned blocks) ----
    tb = min(tb, _round_up(B, 8))
    B_pad = _round_up(B, tb)
    # v7x shards "parallel" grid axes over 2 TensorCores: keep >= 2 i-blocks when B allows.
    if B_pad // tb < 2 and B_pad > 8:
        tb = _round_up(B_pad // 2, 8)
        B_pad = _round_up(B, tb)
    tv = min(tv, _round_up(V, 128))
    V_pad = _round_up(V, tv)
    D_pad = _round_up(D, 128)

    if B_pad != B or V_pad != V:
        w = jnp.pad(w, ((0, B_pad - B), (0, V_pad - V)))    # padded rows/cols -> zero weight
    if V_pad != V or D_pad != D:
        feat_c = jnp.pad(feat_c, ((0, V_pad - V), (0, D_pad - D)))

    # ---- VMEM accounting (BlockSpec double-buffers every block, even constant-index) ----
    isz = jnp.dtype(compute_dtype).itemsize
    feat_resident = bool(2 * V_pad * D_pad * isz <= feat_vmem_budget)
    if feat_resident:
        feat_spec = pl.BlockSpec((V_pad, D_pad), lambda i, k: (0, 0))
        feat_vmem = 2 * V_pad * D_pad * isz
    else:
        feat_spec = pl.BlockSpec((tv, D_pad), lambda i, k: (k, 0))
        feat_vmem = 2 * tv * D_pad * isz
    vmem_needed = (2 * tb * tv * isz               # double-buffered w tiles
                   + feat_vmem                     # feature-matrix buffers
                   + 2 * tb * D_pad * 4            # double-buffered f32 output block
                   + tb * 128 * 4)                 # (tb, 1) den scratch (lane-padded)
    vmem_limit = min(max(int(vmem_needed * 1.25) + (4 << 20), 12 << 20), 56 << 20)

    grid = (B_pad // tb, V_pad // tv)

    out = pl.pallas_call(
        _make_kernel(tv, feat_resident),
        out_shape=jax.ShapeDtypeStruct((B_pad, D_pad), jnp.float32),
        grid_spec=pltpu.PrefetchScalarGridSpec(
            num_scalar_prefetch=0,
            grid=grid,
            in_specs=[
                pl.BlockSpec((tb, tv), lambda i, k: (i, k)),   # fused weights w
                feat_spec,                                     # feature matrix
            ],
            out_specs=pl.BlockSpec((tb, D_pad), lambda i, k: (i, 0)),
            scratch_shapes=[
                pltpu.VMEM((tb, 1), jnp.float32),   # row-sum (num_neigh) accumulator
            ],
        ),
        compiler_params=pltpu.CompilerParams(
            dimension_semantics=("parallel", "arbitrary"),
            vmem_limit_bytes=vmem_limit,
        ),
    )(w, feat_c)

    return out[:B, :D]


def _reference(nodes, adj, feat_sims, feat):
    V = adj.shape[0]
    adj_rows = adj[nodes]
    sims_rows = feat_sims[nodes]
    member = (adj_rows > 0) | (jnp.arange(V)[None, :] == nodes[:, None])
    w = jnp.where(member, adj_rows + sims_rows, 0.0)
    return (w / jnp.sum(w, axis=1, keepdims=True)) @ feat


def _make_graph(key, V, D, B):
    k1, k2, k3, k4 = jax.random.split(key, 4)
    adj_raw = jax.random.uniform(k1, (V, V), dtype=jnp.float32)
    adj = jnp.where(adj_raw > 0.9, adj_raw, 0.0)
    adj = jnp.maximum(adj, adj.T)                                   # symmetric weighted adjacency
    feat_sims = jax.random.uniform(k2, (V, V), dtype=jnp.float32)   # feature-similarity matrix
    feat = jax.random.normal(k3, (V, D), dtype=jnp.float32)         # self.feat = features(arange(V))
    nodes = jax.random.randint(k4, (B,), 0, V)                      # query nodes
    return nodes, adj, feat_sims, feat


if __name__ == "__main__":
    key = jax.random.PRNGKey(0)
    key_big, key_small = jax.random.split(key)

    # Main case: single k-step (tv clamps to 1024), 2 parallel i-blocks, resident bf16 feat.
    V, D, B = 1024, 128, 512
    nodes, adj, feat_sims, feat = _make_graph(key_big, V, D, B)
    ref = _reference(nodes, adj, feat_sims, feat)

    # Default bf16 stream / bf16 MXU feed — loose tolerance (~3 significant digits).
    out_bf16 = jax.block_until_ready(mean_aggregate(nodes, adj, feat_sims, feat))
    assert out_bf16.shape == (B, D)
    assert jnp.allclose(out_bf16, ref, atol=2e-2, rtol=2e-2), "bf16 mismatch vs reference"

    # Exact f32 path — tight tolerance.
    out_f32 = jax.block_until_ready(
        mean_aggregate(nodes, adj, feat_sims, feat, compute_dtype=jnp.float32))
    assert jnp.allclose(out_f32, ref, atol=2e-4, rtol=2e-4), "f32 mismatch vs reference"

    # Multi-k accumulation with resident feat slicing (tv=512 -> 2 k-steps), f32 tight.
    out_kres = jax.block_until_ready(
        mean_aggregate(nodes, adj, feat_sims, feat, tv=512, compute_dtype=jnp.float32))
    assert jnp.allclose(out_kres, ref, atol=2e-4, rtol=2e-4), "resident multi-k mismatch"

    # Streamed-feat path (budget forced to 0), multi-k, f32 tight.
    out_stream = jax.block_until_ready(
        mean_aggregate(nodes, adj, feat_sims, feat, tv=512,
                       compute_dtype=jnp.float32, feat_vmem_budget=0))
    assert jnp.allclose(out_stream, ref, atol=2e-4, rtol=2e-4), "streamed-feat mismatch"

    # Small case: exercises B/V/D padding (8 / 200->256 / 96->128) and tile clamping.
    V2, D2, B2 = 200, 96, 8
    nodes2, adj2, feat_sims2, feat2 = _make_graph(key_small, V2, D2, B2)
    ref2 = _reference(nodes2, adj2, feat_sims2, feat2)
    out2 = jax.block_until_ready(
        mean_aggregate(nodes2, adj2, feat_sims2, feat2, compute_dtype=jnp.float32))
    assert out2.shape == (B2, D2)
    assert jnp.allclose(out2, ref2, atol=2e-4, rtol=2e-4), "padded-case mismatch vs reference"
    out2_bf16 = jax.block_until_ready(mean_aggregate(nodes2, adj2, feat_sims2, feat2))
    assert jnp.allclose(out2_bf16, ref2, atol=2e-2, rtol=2e-2), "padded-case bf16 mismatch"

    # agg=False path: plain embedding lookup.
    assert jnp.allclose(mean_aggregate(nodes2, adj2, feat_sims2, feat2, agg=False),
                        feat2[nodes2])

    print("KERNEL_OK")
</pallas_src>

<mosaic_0001>
module attributes {stable_mosaic.version = 11 : i64} {
  func.func @kernel(%arg0: i32, %arg1: i32, %arg2: memref<256x1024xbf16, #tpu.memory_space<vmem>>, %arg3: memref<1024x128xbf16, #tpu.memory_space<vmem>>, %arg4: memref<256x128xf32, #tpu.memory_space<vmem>>, %arg5: memref<256x1xf32, #tpu.memory_space<vmem>>) attributes {dimension_semantics = [#tpu.dimension_semantics<parallel>, #tpu.dimension_semantics<arbitrary>], iteration_bounds = array<i64: 2, 1>, scalar_prefetch = 0 : i64, scratch_operands = 1 : i64, tpu.core_type = #tpu.core_type<tc>, window_params = [{transform_indices = @transform_0, window_bounds = array<i64: 256, 1024>}, {pipeline_mode = #tpu.pipeline_mode<synchronous>, transform_indices = @transform_1, window_bounds = array<i64: 1024, 128>}, {transform_indices = @transform_2, window_bounds = array<i64: 256, 128>}]} {
    %c0_i32 = arith.constant 0 : i32
    %0 = arith.cmpi eq, %arg1, %c0_i32 : i32
    %1 = arith.extui %0 : i1 to i32
    %c0_i32_0 = arith.constant 0 : i32
    %2 = arith.cmpi ne, %1, %c0_i32_0 : i32
    scf.if %2 {
      %cst_14 = arith.constant 0.000000e+00 : f32
      %21 = vector.broadcast %cst_14 : f32 to vector<256x128xf32>
      %c0_15 = arith.constant 0 : index
      %c0_16 = arith.constant 0 : index
      %22 = vector.load %arg4[%c0_15, %c0_16] : memref<256x128xf32, #tpu.memory_space<vmem>>, vector<256x128xf32>
      tpu.vector_store %arg4[%c0_15, %c0_16], %21 {strides = array<i32>} : memref<256x128xf32, #tpu.memory_space<vmem>>, vector<256x128xf32>,
      %cst_17 = arith.constant 0.000000e+00 : f32
      %23 = vector.broadcast %cst_17 : f32 to vector<256x1xf32>
      %c0_18 = arith.constant 0 : index
      %c0_19 = arith.constant 0 : index
      %24 = vector.load %arg5[%c0_18, %c0_19] : memref<256x1xf32, #tpu.memory_space<vmem>>, vector<256x1xf32>
      tpu.vector_store %arg5[%c0_18, %c0_19], %23 {strides = array<i32>} : memref<256x1xf32, #tpu.memory_space<vmem>>, vector<256x1xf32>,
    } else {
    }
    %c0 = arith.constant 0 : index
    %c0_1 = arith.constant 0 : index
    %3 = vector.load %arg2[%c0, %c0_1] : memref<256x1024xbf16, #tpu.memory_space<vmem>>, vector<256x1024xbf16>
    %c1024_i32 = arith.constant 1024 : i32
    %4 = arith.muli %arg1, %c1024_i32 : i32
    %5 = tpu.assume_multiple %4, 1024 : i32
    %6 = arith.index_cast %5 : i32 to index
    %c0_2 = arith.constant 0 : index
    %7 = vector.load %arg3[%6, %c0_2] : memref<1024x128xbf16, #tpu.memory_space<vmem>>, vector<1024x128xbf16>
    %c0_3 = arith.constant 0 : index
    %c0_4 = arith.constant 0 : index
    %8 = vector.load %arg4[%c0_3, %c0_4] : memref<256x128xf32, #tpu.memory_space<vmem>>, vector<256x128xf32>
    %cst = arith.constant dense<0.000000e+00> : vector<256x128xf32>
    %9 = tpu.matmul %3, %7, %cst {dimension_numbers = #tpu.dot_dimension_numbers<[1], [0], [0], [1], [0, 0, 1, 1], [], []>} : vector<256x1024xbf16>, vector<1024x128xbf16>, vector<256x128xf32> -> vector<256x128xf32>
    %10 = arith.addf %8, %9 : vector<256x128xf32>
    %c0_5 = arith.constant 0 : index
    %c0_6 = arith.constant 0 : index
    %11 = vector.load %arg4[%c0_5, %c0_6] : memref<256x128xf32, #tpu.memory_space<vmem>>, vector<256x128xf32>
    tpu.vector_store %arg4[%c0_5, %c0_6], %10 {strides = array<i32>} : memref<256x128xf32, #tpu.memory_space<vmem>>, vector<256x128xf32>,
    %c0_7 = arith.constant 0 : index
    %c0_8 = arith.constant 0 : index
    %12 = vector.load %arg5[%c0_7, %c0_8] : memref<256x1xf32, #tpu.memory_space<vmem>>, vector<256x1xf32>
    %13 = arith.extf %3 : vector<256x1024xbf16> to vector<256x1024xf32>
    %cst_9 = arith.constant dense<0.000000e+00> : vector<256xf32>
    %14 = vector.multi_reduction <add>, %13, %cst_9 [1] : vector<256x1024xf32> to vector<256xf32>
    %15 = vector.shape_cast %14 : vector<256xf32> to vector<256x1xf32>
    %16 = arith.addf %12, %15 : vector<256x1xf32>
    %c0_10 = arith.constant 0 : index
    %c0_11 = arith.constant 0 : index
    %17 = vector.load %arg5[%c0_10, %c0_11] : memref<256x1xf32, #tpu.memory_space<vmem>>, vector<256x1xf32>
    tpu.vector_store %arg5[%c0_10, %c0_11], %16 {strides = array<i32>} : memref<256x1xf32, #tpu.memory_space<vmem>>, vector<256x1xf32>,
    %c0_i32_12 = arith.constant 0 : i32
    %18 = arith.cmpi eq, %arg1, %c0_i32_12 : i32
    %19 = arith.extui %18 : i1 to i32
    %c0_i32_13 = arith.constant 0 : i32
    %20 = arith.cmpi ne, %19, %c0_i32_13 : i32
    scf.if %20 {
      %c0_14 = arith.constant 0 : index
      %c0_15 = arith.constant 0 : index
      %21 = vector.load %arg5[%c0_14, %c0_15] : memref<256x1xf32, #tpu.memory_space<vmem>>, vector<256x1xf32>
      %cst_16 = arith.constant 0.000000e+00 : f32
      %22 = vector.broadcast %cst_16 : f32 to vector<256x1xf32>
      %23 = arith.cmpf ogt, %21, %22 : vector<256x1xf32>
      %cst_17 = arith.constant 1.000000e+00 : f32
      %24 = vector.broadcast %cst_17 : f32 to vector<256x1xf32>
      %25 = arith.select %23, %21, %24 : vector<256x1xi1>, vector<256x1xf32>
      %26 = tpu.reciprocal %25 : vector<256x1xf32> -> vector<256x1xf32>
      %c0_18 = arith.constant 0 : index
      %c0_19 = arith.constant 0 : index
      %27 = vector.load %arg4[%c0_18, %c0_19] : memref<256x128xf32, #tpu.memory_space<vmem>>, vector<256x128xf32>
      %28 = vector.broadcast %26 : vector<256x1xf32> to vector<256x128xf32>
      %29 = arith.mulf %27, %28 : vector<256x128xf32>
      %c0_20 = arith.constant 0 : index
      %c0_21 = arith.constant 0 : index
      %30 = vector.load %arg4[%c0_20, %c0_21] : memref<256x128xf32, #tpu.memory_space<vmem>>, vector<256x128xf32>
      tpu.vector_store %arg4[%c0_20, %c0_21], %29 {strides = array<i32>} : memref<256x128xf32, #tpu.memory_space<vmem>>, vector<256x128xf32>,
    } else {
    }
    return
  }
  func.func @transform_0(%arg0: i32, %arg1: i32) -> (i32, i32) {
    %c0_i32 = arith.constant 0 : i32
    return %arg0, %arg1 : i32, i32
  }
  func.func @transform_1(%arg0: i32, %arg1: i32) -> (i32, i32) {
    %c0_i32 = arith.constant 0 : i32
    %c0_i32_0 = arith.constant 0 : i32
    %c0_i32_1 = arith.constant 0 : i32
    return %c0_i32, %c0_i32_0 : i32, i32
  }
  func.func @transform_2(%arg0: i32, %arg1: i32) -> (i32, i32) {
    %c0_i32 = arith.constant 0 : i32
    %c0_i32_0 = arith.constant 0 : i32
    return %arg0, %c0_i32 : i32, i32
  }
}

</mosaic_0001>

<llo_original>
// kernel: mean_aggregate.1
$region0: #{mean_aggregate.1}
  #allocation0 [shape = 'u32[]', space=smem, size = 0x4, offset = 0x4, fixed_abs, tag = 'smem constant byte address 0x4 - core index']
  #allocation1 [shape = 'u32[144,128]{1,0:T(1,128)}', space=vmem, size = 0x12000, scoped, tag = 'internal scratch']
  #allocation2 [shape = 'f32[256,1]{1,0:T(8,128)}', space=vmem, size = 0x20000, scoped, tag = 'scratch operand']
  %s0 = inlined_call_operand.vmem [shape: bf16[512,1024], index: 0, kind: input, shape index: {}]
  %s1 = inlined_call_operand.vmem [shape: bf16[1024,128], index: 1, kind: input, shape index: {}]
  %s2 = inlined_call_operand.hbm [shape: f32[512,128], index: 2, kind: output, shape index: {}]
  %s3 = sld [smem:[#allocation0]]
  $region49: #{mean_aggregate.1} parent=0
    _
  %s5 = ssub.s32 1, %s3
  %s6 = scalar_select 0, %s5, %s3
  $region1: #{mean_aggregate.1} parent=0
    #allocation3 [shape = 'u8[262144]{0}', space=vmem, size = 0x40000, scoped, tag = 'output window, operand 0']
    #allocation4 [shape = 's32[2]{0}', space=sflag, size = 0x8, scoped, tag = 'scoped memory for mean_aggregate.1']
    %7 = vsyncpa [#allocation4], 0
    %s8 = scalar_lea.sflag [#allocation4], 1
    %9 = vsyncpa %s8, 0
    loop: start=0, step=1, limit=4
    $region2: #{mean_aggregate.1} parent=1 // loop_pre_header
      _
    $region3: #{mean_aggregate.1} parent=1 // loop_header
      %s11 = sphi 0, %s15
      %p12 = scmp.ge.s32.totalorder %s11, 4
      %s18 = sphi 0, %s30
      %s19 = sphi 0, %s26
      %s20 = sphi 0, %s18
      %s21 = sphi 0, %s19
      %s22 = sphi 0, %s20
      %s23 = sphi 0, %s21
      %s35 = sphi 0, %s37
      %s38 = sphi 0, %s35
      %s39 = sphi 0, %s38
      %s55 = sphi 0, %s39
      %s59 = sphi 0, %s59
      %s61 = sphi 0, %s59
      %s62 = sphi 0, %s61
      %s76 = sphi 0, %s62
      %s82 = sphi 0, %s84
      %s85 = sphi 0, %s82
      %s86 = sphi 0, %s85
      %s102 = sphi 0, %s86
    $region4: #{mean_aggregate.1} parent=1 // loop_header_branch
      %14 = sbr.rel (%p12) target = $region8
    $region5: #{mean_aggregate.1} parent=1 // loop_body
      %s16 = ssub.s32 %s11, 1
      %s17 = ssub.s32 %s11, 2
      %s24 = sadd.s32 1, %s19
      %p25 = scmp.ge.s32.totalorder %s24, 1
      %s26 = scalar_select %p25, 0, %s24
      %s27 = sadd.s32 1, %s18
      %s28 = scalar_select %p25, %s27, %s18
      %p29 = scmp.ge.s32.totalorder %s28, 2
      %s30 = scalar_select %p29, 0, %s28
      %s31 = ssub.s32 %s18, %s30
      %s32 = ssub.s32 %s19, %s26
      %s33 = sor.u32 %s31, %s32
      %p34 = scmp.eq.s32.totalorder %s33, 0
      %s36 = sadd.s32 %s35, 1
      %s37 = scalar_select %p34, %s35, %s36
      %p40 = pneg %p34
      %p41 = scmp.eq.s32.totalorder %s11, 1
      %p42 = por %p40, %p41
      %p43 = scmp.ne.s32.totalorder %s35, %s38
      %p44 = scmp.eq.s32.totalorder %s11, 0
      %p45 = por %p43, %p44
      %p46 = scmp.ne.s32.totalorder %s35, %s38
      %p47 = scmp.eq.s32.totalorder %s16, 1
      %p48 = por %p46, %p47
      %p49 = scmp.ne.s32.totalorder %s38, %s39
      %p50 = scmp.eq.s32.totalorder %s16, 0
      %p51 = por %p49, %p50
      %p52 = scmp.ne.s32.totalorder %s38, %s39
      %p53 = scmp.eq.s32.totalorder %s17, 1
      %p54 = por %p52, %p53
      %p56 = scmp.ne.s32.totalorder %s39, %s55
      %p57 = scmp.eq.s32.totalorder %s17, 0
      %p58 = por %p56, %p57
      %s60 = sadd.s32 %s59, 1
      %p63 = scmp.eq.s32.totalorder %s11, 1
      %p64 = scmp.ne.s32.totalorder %s59, %s61
      %p65 = scmp.eq.s32.totalorder %s11, 0
      %p66 = por %p64, %p65
      %p67 = scmp.ne.s32.totalorder %s59, %s61
      %p68 = scmp.eq.s32.totalorder %s16, 1
      %p69 = por %p67, %p68
      %p70 = scmp.ne.s32.totalorder %s61, %s62
      %p71 = scmp.eq.s32.totalorder %s16, 0
      %p72 = por %p70, %p71
      %p73 = scmp.ne.s32.totalorder %s61, %s62
      %p74 = scmp.eq.s32.totalorder %s17, 1
      %p75 = por %p73, %p74
      %p77 = scmp.ne.s32.totalorder %s62, %s76
      %p78 = scmp.eq.s32.totalorder %s17, 0
      %p79 = por %p77, %p78
      %s80 = ssub.s32 %s18, %s30
      %p81 = scmp.eq.s32.totalorder %s80, 0
      %s83 = sadd.s32 %s82, 1
      %s84 = scalar_select %p81, %s82, %s83
      %p87 = pneg %p81
      %p88 = scmp.eq.s32.totalorder %s11, 1
      %p89 = por %p87, %p88
      %p90 = scmp.ne.s32.totalorder %s82, %s85
      %p91 = scmp.eq.s32.totalorder %s11, 0
      %p92 = por %p90, %p91
      %p93 = scmp.ne.s32.totalorder %s82, %s85
      %p94 = scmp.eq.s32.totalorder %s16, 1
      %p95 = por %p93, %p94
      %p96 = scmp.ne.s32.totalorder %s85, %s86
      %p97 = scmp.eq.s32.totalorder %s16, 0
      %p98 = por %p96, %p97
      %p99 = scmp.ne.s32.totalorder %s85, %s86
      %p100 = scmp.eq.s32.totalorder %s17, 1
      %p101 = por %p99, %p100
      %p103 = scmp.ne.s32.totalorder %s86, %s102
      %p104 = scmp.eq.s32.totalorder %s17, 0
      %p105 = por %p103, %p104
      %p106 = scmp.le.s32.totalorder 1, %s11
      %p107 = scmp.lt.s32.totalorder %s11, 3
      %p108 = pnand %p106, %p107
      %p109 = pneg %p108
      // Predicated region
      $region9: #{mean_aggregate.1} parent=5 // pred_check
        _
      $region10: #{mean_aggregate.1} parent=5 // pred_check_branch
        %111 = sbr.rel (%p108) target = $region12
      $region11: #{mean_aggregate.1} parent=5 // pred_region
        %s112 = ssub.s32 %s11, 1
        // Predicated region
        $region13: #{mean_aggregate.1} parent=11 // pred_check
          %p113 = pneg %p72
        $region14: #{mean_aggregate.1} parent=11 // pred_check_branch
          %115 = sbr.rel (%p113) target = $region16
        $region15: #{mean_aggregate.1} parent=11 // pred_region
          _
        $region16: #{mean_aggregate.1} parent=11 // pred_fallthru
          _
      $region12: #{mean_aggregate.1} parent=5 // pred_fallthru
        _
      %p116 = scmp.lt.s32.totalorder %s11, 2
      // Predicated region
      $region17: #{mean_aggregate.1} parent=5 // pred_check
        %p117 = pneg %p116
      $region18: #{mean_aggregate.1} parent=5 // pred_check_branch
        %119 = sbr.rel (%p117) target = $region20
      $region19: #{mean_aggregate.1} parent=5 // pred_region
        // Predicated region
        $region21: #{mean_aggregate.1} parent=19 // pred_check
          %p120 = pneg %p45
        $region22: #{mean_aggregate.1} parent=19 // pred_check_branch
          %122 = sbr.rel (%p120) target = $region24
        $region23: #{mean_aggregate.1} parent=19 // pred_region
          %s123 = smul.u32 32, %s18
          %s124 = smul.u32 8, %s19
          %p125 = scmp.lt.s32.totalorder %s123, 63
          %s126 = scalar_select %p125, %s123, 63
          %p127 = scmp.lt.s32.totalorder %s124, 7
          %s128 = scalar_select %p127, %s124, 7
          %s129 = smul.addr %s126, 8
          %s130 = sadd.s32 %s128, %s129
          %s131 = smul.addr %s130, 4
          %s132 = scalar_lea.vmem %s0, %s131
          %s133 = smul.u32 32, %s18
          %s134 = smul.u32 8, %s19
        $region24: #{mean_aggregate.1} parent=19 // pred_fallthru
          _
      $region20: #{mean_aggregate.1} parent=5 // pred_fallthru
        _
      %p135 = scmp.le.s32.totalorder 1, %s11
      %p136 = scmp.lt.s32.totalorder %s11, 3
      %p137 = pnand %p135, %p136
      %p138 = pneg %p137
      // Predicated region
      $region25: #{mean_aggregate.1} parent=5 // pred_check
        _
      $region26: #{mean_aggregate.1} parent=5 // pred_check_branch
        %140 = sbr.rel (%p137) target = $region28
      $region27: #{mean_aggregate.1} parent=5 // pred_region
        %s141 = ssub.s32 %s11, 1
        %s142 = smul.u32 32, %s20
        %s143 = smul.u32 8, %s21
        %p144 = scmp.lt.s32.totalorder %s142, 63
        %s145 = scalar_select %p144, %s142, 63
        %p146 = scmp.lt.s32.totalorder %s143, 7
        %s147 = scalar_select %p146, %s143, 7
        %s148 = smul.addr %s145, 8
        %s149 = sadd.s32 %s147, %s148
        %s150 = smul.addr %s149, 4
        %s151 = scalar_lea.vmem %s0, %s150
        %p152 = pneg %p51
        %p153 = pneg %p48
        %p154 = pneg %p72
        %p155 = pneg %p69
        %p156 = pneg %p98
        %p157 = pneg %p95
        %s158 = sand.u32 %s85, 1
        %s159 = scalar_lea.sflag [#allocation4], %s158
        %s160 = sand.u32 %s85, 1
        %s161 = smul.addr %s160, 256
        %s162 = scalar_lea.vmem [#allocation3], %s161
        %s163 = smul.u32 32, %s20
        %s164 = smul.u32 8, %s21
        %p165 = scmp.lt.s32.totalorder %s163, 63
        %s166 = scalar_select %p165, %s163, 63
        %p167 = scmp.lt.s32.totalorder %s164, 7
        %s168 = scalar_select %p167, %s164, 7
        %s169 = smul.addr %s166, 8
        %s170 = sadd.s32 %s168, %s169
        %s171 = smul.addr %s170, 4
        %s172 = scalar_lea.vmem %s0, %s171
        %s173 = smul.u32 32, %s20
        %s174 = smul.u32 8, %s21
        %s175 = smul.u32 32, %s20
        %p177 = scmp.eq.s32.totalorder %s21, 0
        // Predicated region
        $region29: #{mean_aggregate.1} parent=27 // pred_check
          %p178 = pneg %p177
        $region30: #{mean_aggregate.1} parent=27 // pred_check_branch
          %180 = sbr.rel (%p178) target = $region32
        $region31: #{mean_aggregate.1} parent=27 // pred_region
          %181 = vst [vmem:[%s162] sm:$0xff] 0.0
          %182 = vst [vmem:[%s162 + $0x8] sm:$0xff] 0.0
          %183 = vst [vmem:[%s162 + $0x10] sm:$0xff] 0.0
          %184 = vst [vmem:[%s162 + $0x18] sm:$0xff] 0.0
          %185 = vst [vmem:[%s162 + $0x20] sm:$0xff] 0.0
          %186 = vst [vmem:[%s162 + $0x28] sm:$0xff] 0.0
          %187 = vst [vmem:[%s162 + $0x30] sm:$0xff] 0.0
          %188 = vst [vmem:[%s162 + $0x38] sm:$0xff] 0.0
          %189 = vst [vmem:[%s162 + $0x40] sm:$0xff] 0.0
          %190 = vst [vmem:[%s162 + $0x48] sm:$0xff] 0.0
          %191 = vst [vmem:[%s162 + $0x50] sm:$0xff] 0.0
          %192 = vst [vmem:[%s162 + $0x58] sm:$0xff] 0.0
          %193 = vst [vmem:[%s162 + $0x60] sm:$0xff] 0.0
          %194 = vst [vmem:[%s162 + $0x68] sm:$0xff] 0.0
          %195 = vst [vmem:[%s162 + $0x70] sm:$0xff] 0.0
          %196 = vst [vmem:[%s162 + $0x78] sm:$0xff] 0.0
          %197 = vst [vmem:[%s162 + $0x80] sm:$0xff] 0.0
          %198 = vst [vmem:[%s162 + $0x88] sm:$0xff] 0.0
          %199 = vst [vmem:[%s162 + $0x90] sm:$0xff] 0.0
          %200 = vst [vmem:[%s162 + $0x98] sm:$0xff] 0.0
          %201 = vst [vmem:[%s162 + $0xa0] sm:$0xff] 0.0
          %202 = vst [vmem:[%s162 + $0xa8] sm:$0xff] 0.0
          %203 = vst [vmem:[%s162 + $0xb0] sm:$0xff] 0.0
          %204 = vst [vmem:[%s162 + $0xb8] sm:$0xff] 0.0
          %205 = vst [vmem:[%s162 + $0xc0] sm:$0xff] 0.0
          %206 = vst [vmem:[%s162 + $0xc8] sm:$0xff] 0.0
          %207 = vst [vmem:[%s162 + $0xd0] sm:$0xff] 0.0
          %208 = vst [vmem:[%s162 + $0xd8] sm:$0xff] 0.0
          %209 = vst [vmem:[%s162 + $0xe0] sm:$0xff] 0.0
          %210 = vst [vmem:[%s162 + $0xe8] sm:$0xff] 0.0
          %211 = vst [vmem:[%s162 + $0xf0] sm:$0xff] 0.0
          %212 = vst [vmem:[%s162 + $0xf8] sm:$0xff] 0.0
          %vm213 = vcmask 7168
          %214 = vst.msk [vmem:[#allocation2] sm:$0xff] %vm213, 0.0
          %215 = vst.msk [vmem:[#allocation2 + $0x8] sm:$0xff] %vm213, 0.0
          %216 = vst.msk [vmem:[#allocation2 + $0x10] sm:$0xff] %vm213, 0.0
          %217 = vst.msk [vmem:[#allocation2 + $0x18] sm:$0xff] %vm213, 0.0
          %218 = vst.msk [vmem:[#allocation2 + $0x20] sm:$0xff] %vm213, 0.0
          %219 = vst.msk [vmem:[#allocation2 + $0x28] sm:$0xff] %vm213, 0.0
          %220 = vst.msk [vmem:[#allocation2 + $0x30] sm:$0xff] %vm213, 0.0
          %221 = vst.msk [vmem:[#allocation2 + $0x38] sm:$0xff] %vm213, 0.0
          %222 = vst.msk [vmem:[#allocation2 + $0x40] sm:$0xff] %vm213, 0.0
          %223 = vst.msk [vmem:[#allocation2 + $0x48] sm:$0xff] %vm213, 0.0
          %224 = vst.msk [vmem:[#allocation2 + $0x50] sm:$0xff] %vm213, 0.0
          %225 = vst.msk [vmem:[#allocation2 + $0x58] sm:$0xff] %vm213, 0.0
          %226 = vst.msk [vmem:[#allocation2 + $0x60] sm:$0xff] %vm213, 0.0
          %227 = vst.msk [vmem:[#allocation2 + $0x68] sm:$0xff] %vm213, 0.0
          %228 = vst.msk [vmem:[#allocation2 + $0x70] sm:$0xff] %vm213, 0.0
          %229 = vst.msk [vmem:[#allocation2 + $0x78] sm:$0xff] %vm213, 0.0
          %230 = vst.msk [vmem:[#allocation2 + $0x80] sm:$0xff] %vm213, 0.0
          %231 = vst.msk [vmem:[#allocation2 + $0x88] sm:$0xff] %vm213, 0.0
          %232 = vst.msk [vmem:[#allocation2 + $0x90] sm:$0xff] %vm213, 0.0
          %233 = vst.msk [vmem:[#allocation2 + $0x98] sm:$0xff] %vm213, 0.0
          %234 = vst.msk [vmem:[#allocation2 + $0xa0] sm:$0xff] %vm213, 0.0
          %235 = vst.msk [vmem:[#allocation2 + $0xa8] sm:$0xff] %vm213, 0.0
          %236 = vst.msk [vmem:[#allocation2 + $0xb0] sm:$0xff] %vm213, 0.0
          %237 = vst.msk [vmem:[#allocation2 + $0xb8] sm:$0xff] %vm213, 0.0
          %238 = vst.msk [vmem:[#allocation2 + $0xc0] sm:$0xff] %vm213, 0.0
          %239 = vst.msk [vmem:[#allocation2 + $0xc8] sm:$0xff] %vm213, 0.0
          %240 = vst.msk [vmem:[#allocation2 + $0xd0] sm:$0xff] %vm213, 0.0
          %241 = vst.msk [vmem:[#allocation2 + $0xd8] sm:$0xff] %vm213, 0.0
          %242 = vst.msk [vmem:[#allocation2 + $0xe0] sm:$0xff] %vm213, 0.0
          %243 = vst.msk [vmem:[#allocation2 + $0xe8] sm:$0xff] %vm213, 0.0
          %244 = vst.msk [vmem:[#allocation2 + $0xf0] sm:$0xff] %vm213, 0.0
          %245 = vst.msk [vmem:[#allocation2 + $0xf8] sm:$0xff] %vm213, 0.0
        $region32: #{mean_aggregate.1} parent=27 // pred_fallthru
          _
        %v246 = vld [vmem:[%s172] sm:$0xff]
        %v247 = vld [vmem:[%s172 + $0x8] sm:$0xff]
        %v248 = vld [vmem:[%s172 + $0x10] sm:$0xff]
        %v249 = vld [vmem:[%s172 + $0x18] sm:$0xff]
        %v250 = vld [vmem:[%s172 + $0x20] sm:$0xff]
        %v251 = vld [vmem:[%s172 + $0x28] sm:$0xff]
        %v252 = vld [vmem:[%s172 + $0x30] sm:$0xff]
        %v253 = vld [vmem:[%s172 + $0x38] sm:$0xff]
        %v254 = vld [vmem:[%s172 + $0x40] sm:$0xff]
        %v255 = vld [vmem:[%s172 + $0x48] sm:$0xff]
        %v256 = vld [vmem:[%s172 + $0x50] sm:$0xff]
        %v257 = vld [vmem:[%s172 + $0x58] sm:$0xff]
        %v258 = vld [vmem:[%s172 + $0x60] sm:$0xff]
        %v259 = vld [vmem:[%s172 + $0x68] sm:$0xff]
        %v260 = vld [vmem:[%s172 + $0x70] sm:$0xff]
        %v261 = vld [vmem:[%s172 + $0x78] sm:$0xff]
        %v262 = vld [vmem:[%s172 + $0x80] sm:$0xff]
        %v263 = vld [vmem:[%s172 + $0x88] sm:$0xff]
        %v264 = vld [vmem:[%s172 + $0x90] sm:$0xff]
        %v265 = vld [vmem:[%s172 + $0x98] sm:$0xff]
        %v266 = vld [vmem:[%s172 + $0xa0] sm:$0xff]
        %v267 = vld [vmem:[%s172 + $0xa8] sm:$0xff]
        %v268 = vld [vmem:[%s172 + $0xb0] sm:$0xff]
        %v269 = vld [vmem:[%s172 + $0xb8] sm:$0xff]
        %v270 = vld [vmem:[%s172 + $0xc0] sm:$0xff]
        %v271 = vld [vmem:[%s172 + $0xc8] sm:$0xff]
        %v272 = vld [vmem:[%s172 + $0xd0] sm:$0xff]
        %v273 = vld [vmem:[%s172 + $0xd8] sm:$0xff]
        %v274 = vld [vmem:[%s172 + $0xe0] sm:$0xff]
        %v275 = vld [vmem:[%s172 + $0xe8] sm:$0xff]
        %v276 = vld [vmem:[%s172 + $0xf0] sm:$0xff]
        %v277 = vld [vmem:[%s172 + $0xf8] sm:$0xff]
        %v278 = vld [vmem:[%s172 + $0x100] sm:$0xff]
        %v279 = vld [vmem:[%s172 + $0x108] sm:$0xff]
        %v280 = vld [vmem:[%s172 + $0x110] sm:$0xff]
        %v281 = vld [vmem:[%s172 + $0x118] sm:$0xff]
        %v282 = vld [vmem:[%s172 + $0x120] sm:$0xff]
        %v283 = vld [vmem:[%s172 + $0x128] sm:$0xff]
        %v284 = vld [vmem:[%s172 + $0x130] sm:$0xff]
        %v285 = vld [vmem:[%s172 + $0x138] sm:$0xff]
        %v286 = vld [vmem:[%s172 + $0x140] sm:$0xff]
        %v287 = vld [vmem:[%s172 + $0x148] sm:$0xff]
        %v288 = vld [vmem:[%s172 + $0x150] sm:$0xff]
        %v289 = vld [vmem:[%s172 + $0x158] sm:$0xff]
        %v290 = vld [vmem:[%s172 + $0x160] sm:$0xff]
        %v291 = vld [vmem:[%s172 + $0x168] sm:$0xff]
        %v292 = vld [vmem:[%s172 + $0x170] sm:$0xff]
        %v293 = vld [vmem:[%s172 + $0x178] sm:$0xff]
        %v294 = vld [vmem:[%s172 + $0x180] sm:$0xff]
        %v295 = vld [vmem:[%s172 + $0x188] sm:$0xff]
        %v296 = vld [vmem:[%s172 + $0x190] sm:$0xff]
        %v297 = vld [vmem:[%s172 + $0x198] sm:$0xff]
        %v298 = vld [vmem:[%s172 + $0x1a0] sm:$0xff]
        %v299 = vld [vmem:[%s172 + $0x1a8] sm:$0xff]
        %v300 = vld [vmem:[%s172 + $0x1b0] sm:$0xff]
        %v301 = vld [vmem:[%s172 + $0x1b8] sm:$0xff]
        %v302 = vld [vmem:[%s172 + $0x1c0] sm:$0xff]
        %v303 = vld [vmem:[%s172 + $0x1c8] sm:$0xff]
        %v304 = vld [vmem:[%s172 + $0x1d0] sm:$0xff]
        %v305 = vld [vmem:[%s172 + $0x1d8] sm:$0xff]
        %v306 = vld [vmem:[%s172 + $0x1e0] sm:$0xff]
        %v307 = vld [vmem:[%s172 + $0x1e8] sm:$0xff]
        %v308 = vld [vmem:[%s172 + $0x1f0] sm:$0xff]
        %v309 = vld [vmem:[%s172 + $0x1f8] sm:$0xff]
        %v310 = vld [vmem:[%s172 + $0x200] sm:$0xff]
        %v311 = vld [vmem:[%s172 + $0x208] sm:$0xff]
        %v312 = vld [vmem:[%s172 + $0x210] sm:$0xff]
        %v313 = vld [vmem:[%s172 + $0x218] sm:$0xff]
        %v314 = vld [vmem:[%s172 + $0x220] sm:$0xff]
        %v315 = vld [vmem:[%s172 + $0x228] sm:$0xff]
        %v316 = vld [vmem:[%s172 + $0x230] sm:$0xff]
        %v317 = vld [vmem:[%s172 + $0x238] sm:$0xff]
        %v318 = vld [vmem:[%s172 + $0x240] sm:$0xff]
        %v319 = vld [vmem:[%s172 + $0x248] sm:$0xff]
        %v320 = vld [vmem:[%s172 + $0x250] sm:$0xff]
        %v321 = vld [vmem:[%s172 + $0x258] sm:$0xff]
        %v322 = vld [vmem:[%s172 + $0x260] sm:$0xff]
        %v323 = vld [vmem:[%s172 + $0x268] sm:$0xff]
        %v324 = vld [vmem:[%s172 + $0x270] sm:$0xff]
        %v325 = vld [vmem:[%s172 + $0x278] sm:$0xff]
        %v326 = vld [vmem:[%s172 + $0x280] sm:$0xff]
        %v327 = vld [vmem:[%s172 + $0x288] sm:$0xff]
        %v328 = vld [vmem:[%s172 + $0x290] sm:$0xff]
        %v329 = vld [vmem:[%s172 + $0x298] sm:$0xff]
        %v330 = vld [vmem:[%s172 + $0x2a0] sm:$0xff]
        %v331 = vld [vmem:[%s172 + $0x2a8] sm:$0xff]
        %v332 = vld [vmem:[%s172 + $0x2b0] sm:$0xff]
        %v333 = vld [vmem:[%s172 + $0x2b8] sm:$0xff]
        %v334 = vld [vmem:[%s172 + $0x2c0] sm:$0xff]
        %v335 = vld [vmem:[%s172 + $0x2c8] sm:$0xff]
        %v336 = vld [vmem:[%s172 + $0x2d0] sm:$0xff]
        %v337 = vld [vmem:[%s172 + $0x2d8] sm:$0xff]
        %v338 = vld [vmem:[%s172 + $0x2e0] sm:$0xff]
        %v339 = vld [vmem:[%s172 + $0x2e8] sm:$0xff]
        %v340 = vld [vmem:[%s172 + $0x2f0] sm:$0xff]
        %v341 = vld [vmem:[%s172 + $0x2f8] sm:$0xff]
        %v342 = vld [vmem:[%s172 + $0x300] sm:$0xff]
        %v343 = vld [vmem:[%s172 + $0x308] sm:$0xff]
        %v344 = vld [vmem:[%s172 + $0x310] sm:$0xff]
        %v345 = vld [vmem:[%s172 + $0x318] sm:$0xff]
        %v346 = vld [vmem:[%s172 + $0x320] sm:$0xff]
        %v347 = vld [vmem:[%s172 + $0x328] sm:$0xff]
        %v348 = vld [vmem:[%s172 + $0x330] sm:$0xff]
        %v349 = vld [vmem:[%s172 + $0x338] sm:$0xff]
        %v350 = vld [vmem:[%s172 + $0x340] sm:$0xff]
        %v351 = vld [vmem:[%s172 + $0x348] sm:$0xff]
        %v352 = vld [vmem:[%s172 + $0x350] sm:$0xff]
        %v353 = vld [vmem:[%s172 + $0x358] sm:$0xff]
        %v354 = vld [vmem:[%s172 + $0x360] sm:$0xff]
        %v355 = vld [vmem:[%s172 + $0x368] sm:$0xff]
        %v356 = vld [vmem:[%s172 + $0x370] sm:$0xff]
        %v357 = vld [vmem:[%s172 + $0x378] sm:$0xff]
        %v358 = vld [vmem:[%s172 + $0x380] sm:$0xff]
        %v359 = vld [vmem:[%s172 + $0x388] sm:$0xff]
        %v360 = vld [vmem:[%s172 + $0x390] sm:$0xff]
        %v361 = vld [vmem:[%s172 + $0x398] sm:$0xff]
        %v362 = vld [vmem:[%s172 + $0x3a0] sm:$0xff]
        %v363 = vld [vmem:[%s172 + $0x3a8] sm:$0xff]
        %v364 = vld [vmem:[%s172 + $0x3b0] sm:$0xff]
        %v365 = vld [vmem:[%s172 + $0x3b8] sm:$0xff]
        %v366 = vld [vmem:[%s172 + $0x3c0] sm:$0xff]
        %v367 = vld [vmem:[%s172 + $0x3c8] sm:$0xff]
        %v368 = vld [vmem:[%s172 + $0x3d0] sm:$0xff]
        %v369 = vld [vmem:[%s172 + $0x3d8] sm:$0xff]
        %v370 = vld [vmem:[%s172 + $0x3e0] sm:$0xff]
        %v371 = vld [vmem:[%s172 + $0x3e8] sm:$0xff]
        %v372 = vld [vmem:[%s172 + $0x3f0] sm:$0xff]
        %v373 = vld [vmem:[%s172 + $0x3f8] sm:$0xff]
        %s374 = smul.u32 %s21, 1024
        %s375 = sshra.s32 %s374, 3
        %s376 = sand.u32 %s374, 7
        %s377 = smul.addr %s375, 4
        %s378 = scalar_lea.vmem %s1, %s377
        %v379 = vld [vmem:[%s378] sm:$0xf]
        %v380 = vld [vmem:[%s378 + $0x4] sm:$0xf]
        %v381 = vld [vmem:[%s378 + $0x8] sm:$0xf]
        %v382 = vld [vmem:[%s378 + $0xc] sm:$0xf]
        %v383 = vld [vmem:[%s378 + $0x10] sm:$0xf]
        %v384 = vld [vmem:[%s378 + $0x14] sm:$0xf]
        %v385 = vld [vmem:[%s378 + $0x18] sm:$0xf]
        %v386 = vld [vmem:[%s378 + $0x1c] sm:$0xf]
        %v387 = vld [vmem:[%s378 + $0x20] sm:$0xf]
        %v388 = vld [vmem:[%s378 + $0x24] sm:$0xf]
        %v389 = vld [vmem:[%s378 + $0x28] sm:$0xf]
        %v390 = vld [vmem:[%s378 + $0x2c] sm:$0xf]
        %v391 = vld [vmem:[%s378 + $0x30] sm:$0xf]
        %v392 = vld [vmem:[%s378 + $0x34] sm:$0xf]
        %v393 = vld [vmem:[%s378 + $0x38] sm:$0xf]
        %v394 = vld [vmem:[%s378 + $0x3c] sm:$0xf]
        %v395 = vld [vmem:[%s378 + $0x40] sm:$0xf]
        %v396 = vld [vmem:[%s378 + $0x44] sm:$0xf]
        %v397 = vld [vmem:[%s378 + $0x48] sm:$0xf]
        %v398 = vld [vmem:[%s378 + $0x4c] sm:$0xf]
        %v399 = vld [vmem:[%s378 + $0x50] sm:$0xf]
        %v400 = vld [vmem:[%s378 + $0x54] sm:$0xf]
        %v401 = vld [vmem:[%s378 + $0x58] sm:$0xf]
        %v402 = vld [vmem:[%s378 + $0x5c] sm:$0xf]
        %v403 = vld [vmem:[%s378 + $0x60] sm:$0xf]
        %v404 = vld [vmem:[%s378 + $0x64] sm:$0xf]
        %v405 = vld [vmem:[%s378 + $0x68] sm:$0xf]
        %v406 = vld [vmem:[%s378 + $0x6c] sm:$0xf]
        %v407 = vld [vmem:[%s378 + $0x70] sm:$0xf]
        %v408 = vld [vmem:[%s378 + $0x74] sm:$0xf]
        %v409 = vld [vmem:[%s378 + $0x78] sm:$0xf]
        %v410 = vld [vmem:[%s378 + $0x7c] sm:$0xf]
        %v411 = vld [vmem:[%s378 + $0x80] sm:$0xf]
        %v412 = vld [vmem:[%s378 + $0x84] sm:$0xf]
        %v413 = vld [vmem:[%s378 + $0x88] sm:$0xf]
        %v414 = vld [vmem:[%s378 + $0x8c] sm:$0xf]
        %v415 = vld [vmem:[%s378 + $0x90] sm:$0xf]
        %v416 = vld [vmem:[%s378 + $0x94] sm:$0xf]
        %v417 = vld [vmem:[%s378 + $0x98] sm:$0xf]
        %v418 = vld [vmem:[%s378 + $0x9c] sm:$0xf]
        %v419 = vld [vmem:[%s378 + $0xa0] sm:$0xf]
        %v420 = vld [vmem:[%s378 + $0xa4] sm:$0xf]
        %v421 = vld [vmem:[%s378 + $0xa8] sm:$0xf]
        %v422 = vld [vmem:[%s378 + $0xac] sm:$0xf]
        %v423 = vld [vmem:[%s378 + $0xb0] sm:$0xf]
        %v424 = vld [vmem:[%s378 + $0xb4] sm:$0xf]
        %v425 = vld [vmem:[%s378 + $0xb8] sm:$0xf]
        %v426 = vld [vmem:[%s378 + $0xbc] sm:$0xf]
        %v427 = vld [vmem:[%s378 + $0xc0] sm:$0xf]
        %v428 = vld [vmem:[%s378 + $0xc4] sm:$0xf]
        %v429 = vld [vmem:[%s378 + $0xc8] sm:$0xf]
        %v430 = vld [vmem:[%s378 + $0xcc] sm:$0xf]
        %v431 = vld [vmem:[%s378 + $0xd0] sm:$0xf]
        %v432 = vld [vmem:[%s378 + $0xd4] sm:$0xf]
        %v433 = vld [vmem:[%s378 + $0xd8] sm:$0xf]
        %v434 = vld [vmem:[%s378 + $0xdc] sm:$0xf]
        %v435 = vld [vmem:[%s378 + $0xe0] sm:$0xf]
        %v436 = vld [vmem:[%s378 + $0xe4] sm:$0xf]
        %v437 = vld [vmem:[%s378 + $0xe8] sm:$0xf]
        %v438 = vld [vmem:[%s378 + $0xec] sm:$0xf]
        %v439 = vld [vmem:[%s378 + $0xf0] sm:$0xf]
        %v440 = vld [vmem:[%s378 + $0xf4] sm:$0xf]
        %v441 = vld [vmem:[%s378 + $0xf8] sm:$0xf]
        %v442 = vld [vmem:[%s378 + $0xfc] sm:$0xf]
        %v443 = vld [vmem:[%s378 + $0x100] sm:$0xf]
        %v444 = vld [vmem:[%s378 + $0x104] sm:$0xf]
        %v445 = vld [vmem:[%s378 + $0x108] sm:$0xf]
        %v446 = vld [vmem:[%s378 + $0x10c] sm:$0xf]
        %v447 = vld [vmem:[%s378 + $0x110] sm:$0xf]
        %v448 = vld [vmem:[%s378 + $0x114] sm:$0xf]
        %v449 = vld [vmem:[%s378 + $0x118] sm:$0xf]
        %v450 = vld [vmem:[%s378 + $0x11c] sm:$0xf]
        %v451 = vld [vmem:[%s378 + $0x120] sm:$0xf]
        %v452 = vld [vmem:[%s378 + $0x124] sm:$0xf]
        %v453 = vld [vmem:[%s378 + $0x128] sm:$0xf]
        %v454 = vld [vmem:[%s378 + $0x12c] sm:$0xf]
        %v455 = vld [vmem:[%s378 + $0x130] sm:$0xf]
        %v456 = vld [vmem:[%s378 + $0x134] sm:$0xf]
        %v457 = vld [vmem:[%s378 + $0x138] sm:$0xf]
        %v458 = vld [vmem:[%s378 + $0x13c] sm:$0xf]
        %v459 = vld [vmem:[%s378 + $0x140] sm:$0xf]
        %v460 = vld [vmem:[%s378 + $0x144] sm:$0xf]
        %v461 = vld [vmem:[%s378 + $0x148] sm:$0xf]
        %v462 = vld [vmem:[%s378 + $0x14c] sm:$0xf]
        %v463 = vld [vmem:[%s378 + $0x150] sm:$0xf]
        %v464 = vld [vmem:[%s378 + $0x154] sm:$0xf]
        %v465 = vld [vmem:[%s378 + $0x158] sm:$0xf]
        %v466 = vld [vmem:[%s378 + $0x15c] sm:$0xf]
        %v467 = vld [vmem:[%s378 + $0x160] sm:$0xf]
        %v468 = vld [vmem:[%s378 + $0x164] sm:$0xf]
        %v469 = vld [vmem:[%s378 + $0x168] sm:$0xf]
        %v470 = vld [vmem:[%s378 + $0x16c] sm:$0xf]
        %v471 = vld [vmem:[%s378 + $0x170] sm:$0xf]
        %v472 = vld [vmem:[%s378 + $0x174] sm:$0xf]
        %v473 = vld [vmem:[%s378 + $0x178] sm:$0xf]
        %v474 = vld [vmem:[%s378 + $0x17c] sm:$0xf]
        %v475 = vld [vmem:[%s378 + $0x180] sm:$0xf]
        %v476 = vld [vmem:[%s378 + $0x184] sm:$0xf]
        %v477 = vld [vmem:[%s378 + $0x188] sm:$0xf]
        %v478 = vld [vmem:[%s378 + $0x18c] sm:$0xf]
        %v479 = vld [vmem:[%s378 + $0x190] sm:$0xf]
        %v480 = vld [vmem:[%s378 + $0x194] sm:$0xf]
        %v481 = vld [vmem:[%s378 + $0x198] sm:$0xf]
        %v482 = vld [vmem:[%s378 + $0x19c] sm:$0xf]
        %v483 = vld [vmem:[%s378 + $0x1a0] sm:$0xf]
        %v484 = vld [vmem:[%s378 + $0x1a4] sm:$0xf]
        %v485 = vld [vmem:[%s378 + $0x1a8] sm:$0xf]
        %v486 = vld [vmem:[%s378 + $0x1ac] sm:$0xf]
        %v487 = vld [vmem:[%s378 + $0x1b0] sm:$0xf]
        %v488 = vld [vmem:[%s378 + $0x1b4] sm:$0xf]
        %v489 = vld [vmem:[%s378 + $0x1b8] sm:$0xf]
        %v490 = vld [vmem:[%s378 + $0x1bc] sm:$0xf]
        %v491 = vld [vmem:[%s378 + $0x1c0] sm:$0xf]
        %v492 = vld [vmem:[%s378 + $0x1c4] sm:$0xf]
        %v493 = vld [vmem:[%s378 + $0x1c8] sm:$0xf]
        %v494 = vld [vmem:[%s378 + $0x1cc] sm:$0xf]
        %v495 = vld [vmem:[%s378 + $0x1d0] sm:$0xf]
        %v496 = vld [vmem:[%s378 + $0x1d4] sm:$0xf]
        %v497 = vld [vmem:[%s378 + $0x1d8] sm:$0xf]
        %v498 = vld [vmem:[%s378 + $0x1dc] sm:$0xf]
        %v499 = vld [vmem:[%s378 + $0x1e0] sm:$0xf]
        %v500 = vld [vmem:[%s378 + $0x1e4] sm:$0xf]
        %v501 = vld [vmem:[%s378 + $0x1e8] sm:$0xf]
        %v502 = vld [vmem:[%s378 + $0x1ec] sm:$0xf]
        %v503 = vld [vmem:[%s378 + $0x1f0] sm:$0xf]
        %v504 = vld [vmem:[%s378 + $0x1f4] sm:$0xf]
        %v505 = vld [vmem:[%s378 + $0x1f8] sm:$0xf]
        %v506 = vld [vmem:[%s378 + $0x1fc] sm:$0xf]
        %v507 = vld [vmem:[%s162] sm:$0xff]
        %v508 = vld [vmem:[%s162 + $0x8] sm:$0xff]
        %v509 = vld [vmem:[%s162 + $0x10] sm:$0xff]
        %v510 = vld [vmem:[%s162 + $0x18] sm:$0xff]
        %v511 = vld [vmem:[%s162 + $0x20] sm:$0xff]
        %v512 = vld [vmem:[%s162 + $0x28] sm:$0xff]
        %v513 = vld [vmem:[%s162 + $0x30] sm:$0xff]
        %v514 = vld [vmem:[%s162 + $0x38] sm:$0xff]
        %v515 = vld [vmem:[%s162 + $0x40] sm:$0xff]
        %v516 = vld [vmem:[%s162 + $0x48] sm:$0xff]
        %v517 = vld [vmem:[%s162 + $0x50] sm:$0xff]
        %v518 = vld [vmem:[%s162 + $0x58] sm:$0xff]
        %v519 = vld [vmem:[%s162 + $0x60] sm:$0xff]
        %v520 = vld [vmem:[%s162 + $0x68] sm:$0xff]
        %v521 = vld [vmem:[%s162 + $0x70] sm:$0xff]
        %v522 = vld [vmem:[%s162 + $0x78] sm:$0xff]
        %v523 = vld [vmem:[%s162 + $0x80] sm:$0xff]
        %v524 = vld [vmem:[%s162 + $0x88] sm:$0xff]
        %v525 = vld [vmem:[%s162 + $0x90] sm:$0xff]
        %v526 = vld [vmem:[%s162 + $0x98] sm:$0xff]
        %v527 = vld [vmem:[%s162 + $0xa0] sm:$0xff]
        %v528 = vld [vmem:[%s162 + $0xa8] sm:$0xff]
        %v529 = vld [vmem:[%s162 + $0xb0] sm:$0xff]
        %v530 = vld [vmem:[%s162 + $0xb8] sm:$0xff]
        %v531 = vld [vmem:[%s162 + $0xc0] sm:$0xff]
        %v532 = vld [vmem:[%s162 + $0xc8] sm:$0xff]
        %v533 = vld [vmem:[%s162 + $0xd0] sm:$0xff]
        %v534 = vld [vmem:[%s162 + $0xd8] sm:$0xff]
        %v535 = vld [vmem:[%s162 + $0xe0] sm:$0xff]
        %v536 = vld [vmem:[%s162 + $0xe8] sm:$0xff]
        %v537 = vld [vmem:[%s162 + $0xf0] sm:$0xff]
        %v538 = vld [vmem:[%s162 + $0xf8] sm:$0xff]
        %v667 = vunpack.c.l.b16 %v246
        %v668 = vunpack.c.h.b16 %v246
        %v669 = vunpack.c.l.b16 %v247
        %v670 = vunpack.c.h.b16 %v247
        %v671 = vunpack.c.l.b16 %v248
        %v672 = vunpack.c.h.b16 %v248
        %v673 = vunpack.c.l.b16 %v249
        %v674 = vunpack.c.h.b16 %v249
        %v675 = vunpack.c.l.b16 %v250
        %v676 = vunpack.c.h.b16 %v250
        %v677 = vunpack.c.l.b16 %v251
        %v678 = vunpack.c.h.b16 %v251
        %v679 = vunpack.c.l.b16 %v252
        %v680 = vunpack.c.h.b16 %v252
        %v681 = vunpack.c.l.b16 %v253
        %v682 = vunpack.c.h.b16 %v253
        %v683 = vunpack.c.l.b16 %v254
        %v684 = vunpack.c.h.b16 %v254
        %v685 = vunpack.c.l.b16 %v255
        %v686 = vunpack.c.h.b16 %v255
        %v687 = vunpack.c.l.b16 %v256
        %v688 = vunpack.c.h.b16 %v256
        %v689 = vunpack.c.l.b16 %v257
        %v690 = vunpack.c.h.b16 %v257
        %v691 = vunpack.c.l.b16 %v258
        %v692 = vunpack.c.h.b16 %v258
        %v693 = vunpack.c.l.b16 %v259
        %v694 = vunpack.c.h.b16 %v259
        %v695 = vunpack.c.l.b16 %v260
        %v696 = vunpack.c.h.b16 %v260
        %v697 = vunpack.c.l.b16 %v261
        %v698 = vunpack.c.h.b16 %v261
        %v699 = vunpack.c.l.b16 %v262
        %v700 = vunpack.c.h.b16 %v262
        %v701 = vunpack.c.l.b16 %v263
        %v702 = vunpack.c.h.b16 %v263
        %v703 = vunpack.c.l.b16 %v264
        %v704 = vunpack.c.h.b16 %v264
        %v705 = vunpack.c.l.b16 %v265
        %v706 = vunpack.c.h.b16 %v265
        %v707 = vunpack.c.l.b16 %v266
        %v708 = vunpack.c.h.b16 %v266
        %v709 = vunpack.c.l.b16 %v267
        %v710 = vunpack.c.h.b16 %v267
        %v711 = vunpack.c.l.b16 %v268
        %v712 = vunpack.c.h.b16 %v268
        %v713 = vunpack.c.l.b16 %v269
        %v714 = vunpack.c.h.b16 %v269
        %v715 = vunpack.c.l.b16 %v270
        %v716 = vunpack.c.h.b16 %v270
        %v717 = vunpack.c.l.b16 %v271
        %v718 = vunpack.c.h.b16 %v271
        %v719 = vunpack.c.l.b16 %v272
        %v720 = vunpack.c.h.b16 %v272
        %v721 = vunpack.c.l.b16 %v273
        %v722 = vunpack.c.h.b16 %v273
        %v723 = vunpack.c.l.b16 %v274
        %v724 = vunpack.c.h.b16 %v274
        %v725 = vunpack.c.l.b16 %v275
        %v726 = vunpack.c.h.b16 %v275
        %v727 = vunpack.c.l.b16 %v276
        %v728 = vunpack.c.h.b16 %v276
        %v729 = vunpack.c.l.b16 %v277
        %v730 = vunpack.c.h.b16 %v277
        %v731 = vunpack.c.l.b16 %v278
        %v732 = vunpack.c.h.b16 %v278
        %v733 = vunpack.c.l.b16 %v279
        %v734 = vunpack.c.h.b16 %v279
        %v735 = vunpack.c.l.b16 %v280
        %v736 = vunpack.c.h.b16 %v280
        %v737 = vunpack.c.l.b16 %v281
        %v738 = vunpack.c.h.b16 %v281
        %v739 = vunpack.c.l.b16 %v282
        %v740 = vunpack.c.h.b16 %v282
        %v741 = vunpack.c.l.b16 %v283
        %v742 = vunpack.c.h.b16 %v283
        %v743 = vunpack.c.l.b16 %v284
        %v744 = vunpack.c.h.b16 %v284
        %v745 = vunpack.c.l.b16 %v285
        %v746 = vunpack.c.h.b16 %v285
        %v747 = vunpack.c.l.b16 %v286
        %v748 = vunpack.c.h.b16 %v286
        %v749 = vunpack.c.l.b16 %v287
        %v750 = vunpack.c.h.b16 %v287
        %v751 = vunpack.c.l.b16 %v288
        %v752 = vunpack.c.h.b16 %v288
        %v753 = vunpack.c.l.b16 %v289
        %v754 = vunpack.c.h.b16 %v289
        %v755 = vunpack.c.l.b16 %v290
        %v756 = vunpack.c.h.b16 %v290
        %v757 = vunpack.c.l.b16 %v291
        %v758 = vunpack.c.h.b16 %v291
        %v759 = vunpack.c.l.b16 %v292
        %v760 = vunpack.c.h.b16 %v292
        %v761 = vunpack.c.l.b16 %v293
        %v762 = vunpack.c.h.b16 %v293
        %v763 = vunpack.c.l.b16 %v294
        %v764 = vunpack.c.h.b16 %v294
        %v765 = vunpack.c.l.b16 %v295
        %v766 = vunpack.c.h.b16 %v295
        %v767 = vunpack.c.l.b16 %v296
        %v768 = vunpack.c.h.b16 %v296
        %v769 = vunpack.c.l.b16 %v297
        %v770 = vunpack.c.h.b16 %v297
        %v771 = vunpack.c.l.b16 %v298
        %v772 = vunpack.c.h.b16 %v298
        %v773 = vunpack.c.l.b16 %v299
        %v774 = vunpack.c.h.b16 %v299
        %v775 = vunpack.c.l.b16 %v300
        %v776 = vunpack.c.h.b16 %v300
        %v777 = vunpack.c.l.b16 %v301
        %v778 = vunpack.c.h.b16 %v301
        %v779 = vunpack.c.l.b16 %v302
        %v780 = vunpack.c.h.b16 %v302
        %v781 = vunpack.c.l.b16 %v303
        %v782 = vunpack.c.h.b16 %v303
        %v783 = vunpack.c.l.b16 %v304
        %v784 = vunpack.c.h.b16 %v304
        %v785 = vunpack.c.l.b16 %v305
        %v786 = vunpack.c.h.b16 %v305
        %v787 = vunpack.c.l.b16 %v306
        %v788 = vunpack.c.h.b16 %v306
        %v789 = vunpack.c.l.b16 %v307
        %v790 = vunpack.c.h.b16 %v307
        %v791 = vunpack.c.l.b16 %v308
        %v792 = vunpack.c.h.b16 %v308
        %v793 = vunpack.c.l.b16 %v309
        %v794 = vunpack.c.h.b16 %v309
        %v795 = vunpack.c.l.b16 %v310
        %v796 = vunpack.c.h.b16 %v310
        %v797 = vunpack.c.l.b16 %v311
        %v798 = vunpack.c.h.b16 %v311
        %v799 = vunpack.c.l.b16 %v312
        %v800 = vunpack.c.h.b16 %v312
        %v801 = vunpack.c.l.b16 %v313
        %v802 = vunpack.c.h.b16 %v313
        %v803 = vunpack.c.l.b16 %v314
        %v804 = vunpack.c.h.b16 %v314
        %v805 = vunpack.c.l.b16 %v315
        %v806 = vunpack.c.h.b16 %v315
        %v807 = vunpack.c.l.b16 %v316
        %v808 = vunpack.c.h.b16 %v316
        %v809 = vunpack.c.l.b16 %v317
        %v810 = vunpack.c.h.b16 %v317
        %v811 = vunpack.c.l.b16 %v318
        %v812 = vunpack.c.h.b16 %v318
        %v813 = vunpack.c.l.b16 %v319
        %v814 = vunpack.c.h.b16 %v319
        %v815 = vunpack.c.l.b16 %v320
        %v816 = vunpack.c.h.b16 %v320
        %v817 = vunpack.c.l.b16 %v321
        %v818 = vunpack.c.h.b16 %v321
        %v819 = vunpack.c.l.b16 %v322
        %v820 = vunpack.c.h.b16 %v322
        %v821 = vunpack.c.l.b16 %v323
        %v822 = vunpack.c.h.b16 %v323
        %v823 = vunpack.c.l.b16 %v324
        %v824 = vunpack.c.h.b16 %v324
        %v825 = vunpack.c.l.b16 %v325
        %v826 = vunpack.c.h.b16 %v325
        %v827 = vunpack.c.l.b16 %v326
        %v828 = vunpack.c.h.b16 %v326
        %v829 = vunpack.c.l.b16 %v327
        %v830 = vunpack.c.h.b16 %v327
        %v831 = vunpack.c.l.b16 %v328
        %v832 = vunpack.c.h.b16 %v328
        %v833 = vunpack.c.l.b16 %v329
        %v834 = vunpack.c.h.b16 %v329
        %v835 = vunpack.c.l.b16 %v330
        %v836 = vunpack.c.h.b16 %v330
        %v837 = vunpack.c.l.b16 %v331
        %v838 = vunpack.c.h.b16 %v331
        %v839 = vunpack.c.l.b16 %v332
        %v840 = vunpack.c.h.b16 %v332
        %v841 = vunpack.c.l.b16 %v333
        %v842 = vunpack.c.h.b16 %v333
        %v843 = vunpack.c.l.b16 %v334
        %v844 = vunpack.c.h.b16 %v334
        %v845 = vunpack.c.l.b16 %v335
        %v846 = vunpack.c.h.b16 %v335
        %v847 = vunpack.c.l.b16 %v336
        %v848 = vunpack.c.h.b16 %v336
        %v849 = vunpack.c.l.b16 %v337
        %v850 = vunpack.c.h.b16 %v337
        %v851 = vunpack.c.l.b16 %v338
        %v852 = vunpack.c.h.b16 %v338
        %v853 = vunpack.c.l.b16 %v339
        %v854 = vunpack.c.h.b16 %v339
        %v855 = vunpack.c.l.b16 %v340
        %v856 = vunpack.c.h.b16 %v340
        %v857 = vunpack.c.l.b16 %v341
        %v858 = vunpack.c.h.b16 %v341
        %v859 = vunpack.c.l.b16 %v342
        %v860 = vunpack.c.h.b16 %v342
        %v861 = vunpack.c.l.b16 %v343
        %v862 = vunpack.c.h.b16 %v343
        %v863 = vunpack.c.l.b16 %v344
        %v864 = vunpack.c.h.b16 %v344
        %v865 = vunpack.c.l.b16 %v345
        %v866 = vunpack.c.h.b16 %v345
        %v867 = vunpack.c.l.b16 %v346
        %v868 = vunpack.c.h.b16 %v346
        %v869 = vunpack.c.l.b16 %v347
        %v870 = vunpack.c.h.b16 %v347
        %v871 = vunpack.c.l.b16 %v348
        %v872 = vunpack.c.h.b16 %v348
        %v873 = vunpack.c.l.b16 %v349
        %v874 = vunpack.c.h.b16 %v349
        %v875 = vunpack.c.l.b16 %v350
        %v876 = vunpack.c.h.b16 %v350
        %v877 = vunpack.c.l.b16 %v351
        %v878 = vunpack.c.h.b16 %v351
        %v879 = vunpack.c.l.b16 %v352
        %v880 = vunpack.c.h.b16 %v352
        %v881 = vunpack.c.l.b16 %v353
        %v882 = vunpack.c.h.b16 %v353
        %v883 = vunpack.c.l.b16 %v354
        %v884 = vunpack.c.h.b16 %v354
        %v885 = vunpack.c.l.b16 %v355
        %v886 = vunpack.c.h.b16 %v355
        %v887 = vunpack.c.l.b16 %v356
        %v888 = vunpack.c.h.b16 %v356
        %v889 = vunpack.c.l.b16 %v357
        %v890 = vunpack.c.h.b16 %v357
        %v891 = vunpack.c.l.b16 %v358
        %v892 = vunpack.c.h.b16 %v358
        %v893 = vunpack.c.l.b16 %v359
        %v894 = vunpack.c.h.b16 %v359
        %v895 = vunpack.c.l.b16 %v360
        %v896 = vunpack.c.h.b16 %v360
        %v897 = vunpack.c.l.b16 %v361
        %v898 = vunpack.c.h.b16 %v361
        %v899 = vunpack.c.l.b16 %v362
        %v900 = vunpack.c.h.b16 %v362
        %v901 = vunpack.c.l.b16 %v363
        %v902 = vunpack.c.h.b16 %v363
        %v903 = vunpack.c.l.b16 %v364
        %v904 = vunpack.c.h.b16 %v364
        %v905 = vunpack.c.l.b16 %v365
        %v906 = vunpack.c.h.b16 %v365
        %v907 = vunpack.c.l.b16 %v366
        %v908 = vunpack.c.h.b16 %v366
        %v909 = vunpack.c.l.b16 %v367
        %v910 = vunpack.c.h.b16 %v367
        %v911 = vunpack.c.l.b16 %v368
        %v912 = vunpack.c.h.b16 %v368
        %v913 = vunpack.c.l.b16 %v369
        %v914 = vunpack.c.h.b16 %v369
        %v915 = vunpack.c.l.b16 %v370
        %v916 = vunpack.c.h.b16 %v370
        %v917 = vunpack.c.l.b16 %v371
        %v918 = vunpack.c.h.b16 %v371
        %v919 = vunpack.c.l.b16 %v372
        %v920 = vunpack.c.h.b16 %v372
        %v921 = vunpack.c.l.b16 %v373
        %v922 = vunpack.c.h.b16 %v373
        %v923 = vpack.c.b16 %v675, %v667
        %v924 = vpack.c.b16 %v676, %v668
        %v925 = vpack.c.b16 %v677, %v669
        %v926 = vpack.c.b16 %v678, %v670
        %v927 = vpack.c.b16 %v679, %v671
        %v928 = vpack.c.b16 %v680, %v672
        %v929 = vpack.c.b16 %v681, %v673
        %v930 = vpack.c.b16 %v682, %v674
        %v931 = vpack.c.b16 %v691, %v683
        %v932 = vpack.c.b16 %v692, %v684
        %v933 = vpack.c.b16 %v693, %v685
        %v934 = vpack.c.b16 %v694, %v686
        %v935 = vpack.c.b16 %v695, %v687
        %v936 = vpack.c.b16 %v696, %v688
        %v937 = vpack.c.b16 %v697, %v689
        %v938 = vpack.c.b16 %v698, %v690
        %v939 = vpack.c.b16 %v707, %v699
        %v940 = vpack.c.b16 %v708, %v700
        %v941 = vpack.c.b16 %v709, %v701
        %v942 = vpack.c.b16 %v710, %v702
        %v943 = vpack.c.b16 %v711, %v703
        %v944 = vpack.c.b16 %v712, %v704
        %v945 = vpack.c.b16 %v713, %v705
        %v946 = vpack.c.b16 %v714, %v706
        %v947 = vpack.c.b16 %v723, %v715
        %v948 = vpack.c.b16 %v724, %v716
        %v949 = vpack.c.b16 %v725, %v717
        %v950 = vpack.c.b16 %v726, %v718
        %v951 = vpack.c.b16 %v727, %v719
        %v952 = vpack.c.b16 %v728, %v720
        %v953 = vpack.c.b16 %v729, %v721
        %v954 = vpack.c.b16 %v730, %v722
        %v955 = vpack.c.b16 %v739, %v731
        %v956 = vpack.c.b16 %v740, %v732
        %v957 = vpack.c.b16 %v741, %v733
        %v958 = vpack.c.b16 %v742, %v734
        %v959 = vpack.c.b16 %v743, %v735
        %v960 = vpack.c.b16 %v744, %v736
        %v961 = vpack.c.b16 %v745, %v737
        %v962 = vpack.c.b16 %v746, %v738
        %v963 = vpack.c.b16 %v755, %v747
        %v964 = vpack.c.b16 %v756, %v748
        %v965 = vpack.c.b16 %v757, %v749
        %v966 = vpack.c.b16 %v758, %v750
        %v967 = vpack.c.b16 %v759, %v751
        %v968 = vpack.c.b16 %v760, %v752
        %v969 = vpack.c.b16 %v761, %v753
        %v970 = vpack.c.b16 %v762, %v754
        %v971 = vpack.c.b16 %v771, %v763
        %v972 = vpack.c.b16 %v772, %v764
        %v973 = vpack.c.b16 %v773, %v765
        %v974 = vpack.c.b16 %v774, %v766
        %v975 = vpack.c.b16 %v775, %v767
        %v976 = vpack.c.b16 %v776, %v768
        %v977 = vpack.c.b16 %v777, %v769
        %v978 = vpack.c.b16 %v778, %v770
        %v979 = vpack.c.b16 %v787, %v779
        %v980 = vpack.c.b16 %v788, %v780
        %v981 = vpack.c.b16 %v789, %v781
        %v982 = vpack.c.b16 %v790, %v782
        %v983 = vpack.c.b16 %v791, %v783
        %v984 = vpack.c.b16 %v792, %v784
        %v985 = vpack.c.b16 %v793, %v785
        %v986 = vpack.c.b16 %v794, %v786
        %v987 = vpack.c.b16 %v803, %v795
        %v988 = vpack.c.b16 %v804, %v796
        %v989 = vpack.c.b16 %v805, %v797
        %v990 = vpack.c.b16 %v806, %v798
        %v991 = vpack.c.b16 %v807, %v799
        %v992 = vpack.c.b16 %v808, %v800
        %v993 = vpack.c.b16 %v809, %v801
        %v994 = vpack.c.b16 %v810, %v802
        %v995 = vpack.c.b16 %v819, %v811
        %v996 = vpack.c.b16 %v820, %v812
        %v997 = vpack.c.b16 %v821, %v813
        %v998 = vpack.c.b16 %v822, %v814
        %v999 = vpack.c.b16 %v823, %v815
        %v1000 = vpack.c.b16 %v824, %v816
        %v1001 = vpack.c.b16 %v825, %v817
        %v1002 = vpack.c.b16 %v826, %v818
        %v1003 = vpack.c.b16 %v835, %v827
        %v1004 = vpack.c.b16 %v836, %v828
        %v1005 = vpack.c.b16 %v837, %v829
        %v1006 = vpack.c.b16 %v838, %v830
        %v1007 = vpack.c.b16 %v839, %v831
        %v1008 = vpack.c.b16 %v840, %v832
        %v1009 = vpack.c.b16 %v841, %v833
        %v1010 = vpack.c.b16 %v842, %v834
        %v1011 = vpack.c.b16 %v851, %v843
        %v1012 = vpack.c.b16 %v852, %v844
        %v1013 = vpack.c.b16 %v853, %v845
        %v1014 = vpack.c.b16 %v854, %v846
        %v1015 = vpack.c.b16 %v855, %v847
        %v1016 = vpack.c.b16 %v856, %v848
        %v1017 = vpack.c.b16 %v857, %v849
        %v1018 = vpack.c.b16 %v858, %v850
        %v1019 = vpack.c.b16 %v867, %v859
        %v1020 = vpack.c.b16 %v868, %v860
        %v1021 = vpack.c.b16 %v869, %v861
        %v1022 = vpack.c.b16 %v870, %v862
        %v1023 = vpack.c.b16 %v871, %v863
        %v1024 = vpack.c.b16 %v872, %v864
        %v1025 = vpack.c.b16 %v873, %v865
        %v1026 = vpack.c.b16 %v874, %v866
        %v1027 = vpack.c.b16 %v883, %v875
        %v1028 = vpack.c.b16 %v884, %v876
        %v1029 = vpack.c.b16 %v885, %v877
        %v1030 = vpack.c.b16 %v886, %v878
        %v1031 = vpack.c.b16 %v887, %v879
        %v1032 = vpack.c.b16 %v888, %v880
        %v1033 = vpack.c.b16 %v889, %v881
        %v1034 = vpack.c.b16 %v890, %v882
        %v1035 = vpack.c.b16 %v899, %v891
        %v1036 = vpack.c.b16 %v900, %v892
        %v1037 = vpack.c.b16 %v901, %v893
        %v1038 = vpack.c.b16 %v902, %v894
        %v1039 = vpack.c.b16 %v903, %v895
        %v1040 = vpack.c.b16 %v904, %v896
        %v1041 = vpack.c.b16 %v905, %v897
        %v1042 = vpack.c.b16 %v906, %v898
        %v1043 = vpack.c.b16 %v915, %v907
        %v1044 = vpack.c.b16 %v916, %v908
        %v1045 = vpack.c.b16 %v917, %v909
        %v1046 = vpack.c.b16 %v918, %v910
        %v1047 = vpack.c.b16 %v919, %v911
        %v1048 = vpack.c.b16 %v920, %v912
        %v1049 = vpack.c.b16 %v921, %v913
        %v1050 = vpack.c.b16 %v922, %v914
        %v1307 = vunpack.c.l.b16 %v379
        %v1308 = vunpack.c.l.b16 %v380
        %v1309 = vunpack.c.l.b16 %v381
        %v1310 = vunpack.c.l.b16 %v382
        %v1311 = vunpack.c.l.b16 %v383
        %v1312 = vunpack.c.l.b16 %v384
        %v1313 = vunpack.c.l.b16 %v385
        %v1314 = vunpack.c.l.b16 %v386
        %v1315 = vunpack.c.l.b16 %v387
        %v1316 = vunpack.c.l.b16 %v388
        %v1317 = vunpack.c.l.b16 %v389
        %v1318 = vunpack.c.l.b16 %v390
        %v1319 = vunpack.c.l.b16 %v391
        %v1320 = vunpack.c.l.b16 %v392
        %v1321 = vunpack.c.l.b16 %v393
        %v1322 = vunpack.c.l.b16 %v394
        %v1323 = vunpack.c.l.b16 %v395
        %v1324 = vunpack.c.l.b16 %v396
        %v1325 = vunpack.c.l.b16 %v397
        %v1326 = vunpack.c.l.b16 %v398
        %v1327 = vunpack.c.l.b16 %v399
        %v1328 = vunpack.c.l.b16 %v400
        %v1329 = vunpack.c.l.b16 %v401
        %v1330 = vunpack.c.l.b16 %v402
        %v1331 = vunpack.c.l.b16 %v403
        %v1332 = vunpack.c.l.b16 %v404
        %v1333 = vunpack.c.l.b16 %v405
        %v1334 = vunpack.c.l.b16 %v406
        %v1335 = vunpack.c.l.b16 %v407
        %v1336 = vunpack.c.l.b16 %v408
        %v1337 = vunpack.c.l.b16 %v409
        %v1338 = vunpack.c.l.b16 %v410
        %v1339 = vunpack.c.l.b16 %v411
        %v1340 = vunpack.c.l.b16 %v412
        %v1341 = vunpack.c.l.b16 %v413
        %v1342 = vunpack.c.l.b16 %v414
        %v1343 = vunpack.c.l.b16 %v415
        %v1344 = vunpack.c.l.b16 %v416
        %v1345 = vunpack.c.l.b16 %v417
        %v1346 = vunpack.c.l.b16 %v418
        %v1347 = vunpack.c.l.b16 %v419
        %v1348 = vunpack.c.l.b16 %v420
        %v1349 = vunpack.c.l.b16 %v421
        %v1350 = vunpack.c.l.b16 %v422
        %v1351 = vunpack.c.l.b16 %v423
        %v1352 = vunpack.c.l.b16 %v424
        %v1353 = vunpack.c.l.b16 %v425
        %v1354 = vunpack.c.l.b16 %v426
        %v1355 = vunpack.c.l.b16 %v427
        %v1356 = vunpack.c.l.b16 %v428
        %v1357 = vunpack.c.l.b16 %v429
        %v1358 = vunpack.c.l.b16 %v430
        %v1359 = vunpack.c.l.b16 %v431
        %v1360 = vunpack.c.l.b16 %v432
        %v1361 = vunpack.c.l.b16 %v433
        %v1362 = vunpack.c.l.b16 %v434
        %v1363 = vunpack.c.l.b16 %v435
        %v1364 = vunpack.c.l.b16 %v436
        %v1365 = vunpack.c.l.b16 %v437
        %v1366 = vunpack.c.l.b16 %v438
        %v1367 = vunpack.c.l.b16 %v439
        %v1368 = vunpack.c.l.b16 %v440
        %v1369 = vunpack.c.l.b16 %v441
        %v1370 = vunpack.c.l.b16 %v442
        %v1371 = vunpack.c.l.b16 %v443
        %v1372 = vunpack.c.l.b16 %v444
        %v1373 = vunpack.c.l.b16 %v445
        %v1374 = vunpack.c.l.b16 %v446
        %v1375 = vunpack.c.l.b16 %v447
        %v1376 = vunpack.c.l.b16 %v448
        %v1377 = vunpack.c.l.b16 %v449
        %v1378 = vunpack.c.l.b16 %v450
        %v1379 = vunpack.c.l.b16 %v451
        %v1380 = vunpack.c.l.b16 %v452
        %v1381 = vunpack.c.l.b16 %v453
        %v1382 = vunpack.c.l.b16 %v454
        %v1383 = vunpack.c.l.b16 %v455
        %v1384 = vunpack.c.l.b16 %v456
        %v1385 = vunpack.c.l.b16 %v457
        %v1386 = vunpack.c.l.b16 %v458
        %v1387 = vunpack.c.l.b16 %v459
        %v1388 = vunpack.c.l.b16 %v460
        %v1389 = vunpack.c.l.b16 %v461
        %v1390 = vunpack.c.l.b16 %v462
        %v1391 = vunpack.c.l.b16 %v463
        %v1392 = vunpack.c.l.b16 %v464
        %v1393 = vunpack.c.l.b16 %v465
        %v1394 = vunpack.c.l.b16 %v466
        %v1395 = vunpack.c.l.b16 %v467
        %v1396 = vunpack.c.l.b16 %v468
        %v1397 = vunpack.c.l.b16 %v469
        %v1398 = vunpack.c.l.b16 %v470
        %v1399 = vunpack.c.l.b16 %v471
        %v1400 = vunpack.c.l.b16 %v472
        %v1401 = vunpack.c.l.b16 %v473
        %v1402 = vunpack.c.l.b16 %v474
        %v1403 = vunpack.c.l.b16 %v475
        %v1404 = vunpack.c.l.b16 %v476
        %v1405 = vunpack.c.l.b16 %v477
        %v1406 = vunpack.c.l.b16 %v478
        %v1407 = vunpack.c.l.b16 %v479
        %v1408 = vunpack.c.l.b16 %v480
        %v1409 = vunpack.c.l.b16 %v481
        %v1410 = vunpack.c.l.b16 %v482
        %v1411 = vunpack.c.l.b16 %v483
        %v1412 = vunpack.c.l.b16 %v484
        %v1413 = vunpack.c.l.b16 %v485
        %v1414 = vunpack.c.l.b16 %v486
        %v1415 = vunpack.c.l.b16 %v487
        %v1416 = vunpack.c.l.b16 %v488
        %v1417 = vunpack.c.l.b16 %v489
        %v1418 = vunpack.c.l.b16 %v490
        %v1419 = vunpack.c.l.b16 %v491
        %v1420 = vunpack.c.l.b16 %v492
        %v1421 = vunpack.c.l.b16 %v493
        %v1422 = vunpack.c.l.b16 %v494
        %v1423 = vunpack.c.l.b16 %v495
        %v1424 = vunpack.c.l.b16 %v496
        %v1425 = vunpack.c.l.b16 %v497
        %v1426 = vunpack.c.l.b16 %v498
        %v1427 = vunpack.c.l.b16 %v499
        %v1428 = vunpack.c.l.b16 %v500
        %v1429 = vunpack.c.l.b16 %v501
        %v1430 = vunpack.c.l.b16 %v502
        %v1431 = vunpack.c.l.b16 %v503
        %v1432 = vunpack.c.l.b16 %v504
        %v1433 = vunpack.c.l.b16 %v505
        %v1434 = vunpack.c.l.b16 %v506
        %v1435 = vpack.c.b16 %v1308, %v1307
        %v1436 = vpack.c.b16 %v1310, %v1309
        %v1437 = vpack.c.b16 %v1312, %v1311
        %v1438 = vpack.c.b16 %v1314, %v1313
        %v1439 = vpack.c.b16 %v1316, %v1315
        %v1440 = vpack.c.b16 %v1318, %v1317
        %v1441 = vpack.c.b16 %v1320, %v1319
        %v1442 = vpack.c.b16 %v1322, %v1321
        %v1443 = vpack.c.b16 %v1324, %v1323
        %v1444 = vpack.c.b16 %v1326, %v1325
        %v1445 = vpack.c.b16 %v1328, %v1327
        %v1446 = vpack.c.b16 %v1330, %v1329
        %v1447 = vpack.c.b16 %v1332, %v1331
        %v1448 = vpack.c.b16 %v1334, %v1333
        %v1449 = vpack.c.b16 %v1336, %v1335
        %v1450 = vpack.c.b16 %v1338, %v1337
        %v1451 = vpack.c.b16 %v1340, %v1339
        %v1452 = vpack.c.b16 %v1342, %v1341
        %v1453 = vpack.c.b16 %v1344, %v1343
        %v1454 = vpack.c.b16 %v1346, %v1345
        %v1455 = vpack.c.b16 %v1348, %v1347
        %v1456 = vpack.c.b16 %v1350, %v1349
        %v1457 = vpack.c.b16 %v1352, %v1351
        %v1458 = vpack.c.b16 %v1354, %v1353
        %v1459 = vpack.c.b16 %v1356, %v1355
        %v1460 = vpack.c.b16 %v1358, %v1357
        %v1461 = vpack.c.b16 %v1360, %v1359
        %v1462 = vpack.c.b16 %v1362, %v1361
        %v1463 = vpack.c.b16 %v1364, %v1363
        %v1464 = vpack.c.b16 %v1366, %v1365
        %v1465 = vpack.c.b16 %v1368, %v1367
        %v1466 = vpack.c.b16 %v1370, %v1369
        %v1467 = vpack.c.b16 %v1372, %v1371
        %v1468 = vpack.c.b16 %v1374, %v1373
        %v1469 = vpack.c.b16 %v1376, %v1375
        %v1470 = vpack.c.b16 %v1378, %v1377
        %v1471 = vpack.c.b16 %v1380, %v1379
        %v1472 = vpack.c.b16 %v1382, %v1381
        %v1473 = vpack.c.b16 %v1384, %v1383
        %v1474 = vpack.c.b16 %v1386, %v1385
        %v1475 = vpack.c.b16 %v1388, %v1387
        %v1476 = vpack.c.b16 %v1390, %v1389
        %v1477 = vpack.c.b16 %v1392, %v1391
        %v1478 = vpack.c.b16 %v1394, %v1393
        %v1479 = vpack.c.b16 %v1396, %v1395
        %v1480 = vpack.c.b16 %v1398, %v1397
        %v1481 = vpack.c.b16 %v1400, %v1399
        %v1482 = vpack.c.b16 %v1402, %v1401
        %v1483 = vpack.c.b16 %v1404, %v1403
        %v1484 = vpack.c.b16 %v1406, %v1405
        %v1485 = vpack.c.b16 %v1408, %v1407
        %v1486 = vpack.c.b16 %v1410, %v1409
        %v1487 = vpack.c.b16 %v1412, %v1411
        %v1488 = vpack.c.b16 %v1414, %v1413
        %v1489 = vpack.c.b16 %v1416, %v1415
        %v1490 = vpack.c.b16 %v1418, %v1417
        %v1491 = vpack.c.b16 %v1420, %v1419
        %v1492 = vpack.c.b16 %v1422, %v1421
        %v1493 = vpack.c.b16 %v1424, %v1423
        %v1494 = vpack.c.b16 %v1426, %v1425
        %v1495 = vpack.c.b16 %v1428, %v1427
        %v1496 = vpack.c.b16 %v1430, %v1429
        %v1497 = vpack.c.b16 %v1432, %v1431
        %v1498 = vpack.c.b16 %v1434, %v1433
        %1563 = vmatprep.subr.bf16.mxu0 0
        %1564 = vmatpush1.bf16.msra.mxu0 %v1442
        %1565 = vmatprep.subr.bf16.mxu0 0
        %1566 = vmatpush1.bf16.msra.mxu0 %v1441
        %1567 = vmatprep.subr.bf16.mxu0 0
        %1568 = vmatpush1.bf16.msra.mxu0 %v1440
        %1569 = vmatprep.subr.bf16.mxu0 0
        %1570 = vmatpush1.bf16.msra.mxu0 %v1439
        %1571 = vmatprep.subr.bf16.mxu0 0
        %1572 = vmatpush1.bf16.msra.mxu0 %v1438
        %1573 = vmatprep.subr.bf16.mxu0 0
        %1574 = vmatpush1.bf16.msra.mxu0 %v1437
        %1575 = vmatprep.subr.bf16.mxu0 0
        %1576 = vmatpush1.bf16.msra.mxu0 %v1436
        %1577 = vmatprep.subr.bf16.mxu0 0
        %1578 = vmatpush1.bf16.msra.mxu0 %v1435
        %1579 = vmatprep.subr.bf16.mxu0 0
        %1580 = vmatpush2.bf16.msra.mxu0 %v1450
        %1581 = vmatprep.subr.bf16.mxu0 0
        %1582 = vmatpush2.bf16.msra.mxu0 %v1449
        %1583 = vmatprep.subr.bf16.mxu0 0
        %1584 = vmatpush2.bf16.msra.mxu0 %v1448
        %1585 = vmatprep.subr.bf16.mxu0 0
        %1586 = vmatpush2.bf16.msra.mxu0 %v1447
        %1587 = vmatprep.subr.bf16.mxu0 0
        %1588 = vmatpush2.bf16.msra.mxu0 %v1446
        %1589 = vmatprep.subr.bf16.mxu0 0
        %1590 = vmatpush2.bf16.msra.mxu0 %v1445
        %1591 = vmatprep.subr.bf16.mxu0 0
        %1592 = vmatpush2.bf16.msra.mxu0 %v1444
        %1593 = vmatprep.subr.bf16.mxu0 0
        %1594 = vmatpush2.bf16.msra.mxu0 %v1443
        %1595 = vmatprep.mubr.bf16.mxu0 %v924
        %1596 = vmatmul.mubr.bf16.gmra.mxu0 %v923
        %v1597 = vpop.f32.mrf.mxu0
        %v1598 = vadd.f32 0.0, %v1597
        %v1599 = vpop.f32.mrf.mxu0
        %v1600 = vpop.f32.mrf.mxu0
        %v1601 = vadd.f32 0.0, %v1600
        %v1602 = vpop.f32.mrf.mxu0
        %1603 = vmatprep.mubr.bf16.mxu0 %v932
        %1604 = vmatmul.mubr.bf16.gmra.mxu0 %v931
        %v1605 = vpop.f32.mrf.mxu0
        %v1606 = vadd.f32 0.0, %v1605
        %v1607 = vpop.f32.mrf.mxu0
        %v1608 = vpop.f32.mrf.mxu0
        %v1609 = vadd.f32 0.0, %v1608
        %v1610 = vpop.f32.mrf.mxu0
        %1611 = vmatprep.mubr.bf16.mxu0 %v940
        %1612 = vmatmul.mubr.bf16.gmra.mxu0 %v939
        %v1613 = vpop.f32.mrf.mxu0
        %v1614 = vadd.f32 0.0, %v1613
        %v1615 = vpop.f32.mrf.mxu0
        %v1616 = vpop.f32.mrf.mxu0
        %v1617 = vadd.f32 0.0, %v1616
        %v1618 = vpop.f32.mrf.mxu0
        %1619 = vmatprep.mubr.bf16.mxu0 %v948
        %1620 = vmatmul.mubr.bf16.gmra.mxu0 %v947
        %v1621 = vpop.f32.mrf.mxu0
        %v1622 = vadd.f32 0.0, %v1621
        %v1623 = vpop.f32.mrf.mxu0
        %v1624 = vpop.f32.mrf.mxu0
        %v1625 = vadd.f32 0.0, %v1624
        %v1626 = vpop.f32.mrf.mxu0
        %1627 = vmatprep.mubr.bf16.mxu0 %v956
        %1628 = vmatmul.mubr.bf16.gmra.mxu0 %v955
        %v1629 = vpop.f32.mrf.mxu0
        %v1630 = vadd.f32 0.0, %v1629
        %v1631 = vpop.f32.mrf.mxu0
        %v1632 = vpop.f32.mrf.mxu0
        %v1633 = vadd.f32 0.0, %v1632
        %v1634 = vpop.f32.mrf.mxu0
        %1635 = vmatprep.mubr.bf16.mxu0 %v964
        %1636 = vmatmul.mubr.bf16.gmra.mxu0 %v963
        %v1637 = vpop.f32.mrf.mxu0
        %v1638 = vadd.f32 0.0, %v1637
        %v1639 = vpop.f32.mrf.mxu0
        %v1640 = vpop.f32.mrf.mxu0
        %v1641 = vadd.f32 0.0, %v1640
        %v1642 = vpop.f32.mrf.mxu0
        %1643 = vmatprep.mubr.bf16.mxu0 %v972
        %1644 = vmatmul.mubr.bf16.gmra.mxu0 %v971
        %v1645 = vpop.f32.mrf.mxu0
        %v1646 = vadd.f32 0.0, %v1645
        %v1647 = vpop.f32.mrf.mxu0
        %v1648 = vpop.f32.mrf.mxu0
        %v1649 = vadd.f32 0.0, %v1648
        %v1650 = vpop.f32.mrf.mxu0
        %1651 = vmatprep.mubr.bf16.mxu0 %v980
        %1652 = vmatmul.mubr.bf16.gmra.mxu0 %v979
        %v1653 = vpop.f32.mrf.mxu0
        %v1654 = vadd.f32 0.0, %v1653
        %v1655 = vpop.f32.mrf.mxu0
        %v1656 = vpop.f32.mrf.mxu0
        %v1657 = vadd.f32 0.0, %v1656
        %v1658 = vpop.f32.mrf.mxu0
        %1659 = vmatprep.mubr.bf16.mxu0 %v988
        %1660 = vmatmul.mubr.bf16.gmra.mxu0 %v987
        %v1661 = vpop.f32.mrf.mxu0
        %v1662 = vadd.f32 0.0, %v1661
        %v1663 = vpop.f32.mrf.mxu0
        %v1664 = vpop.f32.mrf.mxu0
        %v1665 = vadd.f32 0.0, %v1664
        %v1666 = vpop.f32.mrf.mxu0
        %1667 = vmatprep.mubr.bf16.mxu0 %v996
        %1668 = vmatmul.mubr.bf16.gmra.mxu0 %v995
        %v1669 = vpop.f32.mrf.mxu0
        %v1670 = vadd.f32 0.0, %v1669
        %v1671 = vpop.f32.mrf.mxu0
        %v1672 = vpop.f32.mrf.mxu0
        %v1673 = vadd.f32 0.0, %v1672
        %v1674 = vpop.f32.mrf.mxu0
        %1675 = vmatprep.mubr.bf16.mxu0 %v1004
        %1676 = vmatmul.mubr.bf16.gmra.mxu0 %v1003
        %v1677 = vpop.f32.mrf.mxu0
        %v1678 = vadd.f32 0.0, %v1677
        %v1679 = vpop.f32.mrf.mxu0
        %v1680 = vpop.f32.mrf.mxu0
        %v1681 = vadd.f32 0.0, %v1680
        %v1682 = vpop.f32.mrf.mxu0
        %1683 = vmatprep.mubr.bf16.mxu0 %v1012
        %1684 = vmatmul.mubr.bf16.gmra.mxu0 %v1011
        %v1685 = vpop.f32.mrf.mxu0
        %v1686 = vadd.f32 0.0, %v1685
        %v1687 = vpop.f32.mrf.mxu0
        %v1688 = vpop.f32.mrf.mxu0
        %v1689 = vadd.f32 0.0, %v1688
        %v1690 = vpop.f32.mrf.mxu0
        %1691 = vmatprep.mubr.bf16.mxu0 %v1020
        %1692 = vmatmul.mubr.bf16.gmra.mxu0 %v1019
        %v1693 = vpop.f32.mrf.mxu0
        %v1694 = vadd.f32 0.0, %v1693
        %v1695 = vpop.f32.mrf.mxu0
        %v1696 = vpop.f32.mrf.mxu0
        %v1697 = vadd.f32 0.0, %v1696
        %v1698 = vpop.f32.mrf.mxu0
        %1699 = vmatprep.mubr.bf16.mxu0 %v1028
        %1700 = vmatmul.mubr.bf16.gmra.mxu0 %v1027
        %v1701 = vpop.f32.mrf.mxu0
        %v1702 = vadd.f32 0.0, %v1701
        %v1703 = vpop.f32.mrf.mxu0
        %v1704 = vpop.f32.mrf.mxu0
        %v1705 = vadd.f32 0.0, %v1704
        %v1706 = vpop.f32.mrf.mxu0
        %1707 = vmatprep.mubr.bf16.mxu0 %v1036
        %1708 = vmatmul.mubr.bf16.gmra.mxu0 %v1035
        %v1709 = vpop.f32.mrf.mxu0
        %v1710 = vadd.f32 0.0, %v1709
        %v1711 = vpop.f32.mrf.mxu0
        %v1712 = vpop.f32.mrf.mxu0
        %v1713 = vadd.f32 0.0, %v1712
        %v1714 = vpop.f32.mrf.mxu0
        %1715 = vmatprep.mubr.bf16.mxu0 %v1044
        %1716 = vmatmul.mubr.bf16.gmra.mxu0 %v1043
        %v1717 = vpop.f32.mrf.mxu0
        %v1718 = vadd.f32 0.0, %v1717
        %v1719 = vpop.f32.mrf.mxu0
        %v1720 = vpop.f32.mrf.mxu0
        %v1721 = vadd.f32 0.0, %v1720
        %v1722 = vpop.f32.mrf.mxu0
        %1723 = vdwg.mxu0
        %1724 = vmatprep.subr.bf16.mxu0 0
        %1725 = vmatpush1.bf16.msra.mxu0 %v1458
        %1726 = vmatprep.subr.bf16.mxu0 0
        %1727 = vmatpush1.bf16.msra.mxu0 %v1457
        %1728 = vmatprep.subr.bf16.mxu0 0
        %1729 = vmatpush1.bf16.msra.mxu0 %v1456
        %1730 = vmatprep.subr.bf16.mxu0 0
        %1731 = vmatpush1.bf16.msra.mxu0 %v1455
        %1732 = vmatprep.subr.bf16.mxu0 0
        %1733 = vmatpush1.bf16.msra.mxu0 %v1454
        %1734 = vmatprep.subr.bf16.mxu0 0
        %1735 = vmatpush1.bf16.msra.mxu0 %v1453
        %1736 = vmatprep.subr.bf16.mxu0 0
        %1737 = vmatpush1.bf16.msra.mxu0 %v1452
        %1738 = vmatprep.subr.bf16.mxu0 0
        %1739 = vmatpush1.bf16.msra.mxu0 %v1451
        %1740 = vmatprep.subr.bf16.mxu0 0
        %1741 = vmatpush2.bf16.msra.mxu0 %v1466
        %1742 = vmatprep.subr.bf16.mxu0 0
        %1743 = vmatpush2.bf16.msra.mxu0 %v1465
        %1744 = vmatprep.subr.bf16.mxu0 0
        %1745 = vmatpush2.bf16.msra.mxu0 %v1464
        %1746 = vmatprep.subr.bf16.mxu0 0
        %1747 = vmatpush2.bf16.msra.mxu0 %v1463
        %1748 = vmatprep.subr.bf16.mxu0 0
        %1749 = vmatpush2.bf16.msra.mxu0 %v1462
        %1750 = vmatprep.subr.bf16.mxu0 0
        %1751 = vmatpush2.bf16.msra.mxu0 %v1461
        %1752 = vmatprep.subr.bf16.mxu0 0
        %1753 = vmatpush2.bf16.msra.mxu0 %v1460
        %1754 = vmatprep.subr.bf16.mxu0 0
        %1755 = vmatpush2.bf16.msra.mxu0 %v1459
        %1756 = vmatprep.mubr.bf16.mxu0 %v926
        %1757 = vmatmul.mubr.bf16.gmra.mxu0 %v925
        %v1758 = vpop.f32.mrf.mxu0
        %v1759 = vadd.f32 %v1598, %v1758
        %v1760 = vpop.f32.mrf.mxu0
        %v1761 = vpop.f32.mrf.mxu0
        %v1762 = vadd.f32 %v1601, %v1761
        %v1763 = vpop.f32.mrf.mxu0
        %1764 = vmatprep.mubr.bf16.mxu0 %v934
        %1765 = vmatmul.mubr.bf16.gmra.mxu0 %v933
        %v1766 = vpop.f32.mrf.mxu0
        %v1767 = vadd.f32 %v1606, %v1766
        %v1768 = vpop.f32.mrf.mxu0
        %v1769 = vpop.f32.mrf.mxu0
        %v1770 = vadd.f32 %v1609, %v1769
        %v1771 = vpop.f32.mrf.mxu0
        %1772 = vmatprep.mubr.bf16.mxu0 %v942
        %1773 = vmatmul.mubr.bf16.gmra.mxu0 %v941
        %v1774 = vpop.f32.mrf.mxu0
        %v1775 = vadd.f32 %v1614, %v1774
        %v1776 = vpop.f32.mrf.mxu0
        %v1777 = vpop.f32.mrf.mxu0
        %v1778 = vadd.f32 %v1617, %v1777
        %v1779 = vpop.f32.mrf.mxu0
        %1780 = vmatprep.mubr.bf16.mxu0 %v950
        %1781 = vmatmul.mubr.bf16.gmra.mxu0 %v949
        %v1782 = vpop.f32.mrf.mxu0
        %v1783 = vadd.f32 %v1622, %v1782
        %v1784 = vpop.f32.mrf.mxu0
        %v1785 = vpop.f32.mrf.mxu0
        %v1786 = vadd.f32 %v1625, %v1785
        %v1787 = vpop.f32.mrf.mxu0
        %1788 = vmatprep.mubr.bf16.mxu0 %v958
        %1789 = vmatmul.mubr.bf16.gmra.mxu0 %v957
        %v1790 = vpop.f32.mrf.mxu0
        %v1791 = vadd.f32 %v1630, %v1790
        %v1792 = vpop.f32.mrf.mxu0
        %v1793 = vpop.f32.mrf.mxu0
        %v1794 = vadd.f32 %v1633, %v1793
        %v1795 = vpop.f32.mrf.mxu0
        %1796 = vmatprep.mubr.bf16.mxu0 %v966
        %1797 = vmatmul.mubr.bf16.gmra.mxu0 %v965
        %v1798 = vpop.f32.mrf.mxu0
        %v1799 = vadd.f32 %v1638, %v1798
        %v1800 = vpop.f32.mrf.mxu0
        %v1801 = vpop.f32.mrf.mxu0
        %v1802 = vadd.f32 %v1641, %v1801
        %v1803 = vpop.f32.mrf.mxu0
        %1804 = vmatprep.mubr.bf16.mxu0 %v974
        %1805 = vmatmul.mubr.bf16.gmra.mxu0 %v973
        %v1806 = vpop.f32.mrf.mxu0
        %v1807 = vadd.f32 %v1646, %v1806
        %v1808 = vpop.f32.mrf.mxu0
        %v1809 = vpop.f32.mrf.mxu0
        %v1810 = vadd.f32 %v1649, %v1809
        %v1811 = vpop.f32.mrf.mxu0
        %1812 = vmatprep.mubr.bf16.mxu0 %v982
        %1813 = vmatmul.mubr.bf16.gmra.mxu0 %v981
        %v1814 = vpop.f32.mrf.mxu0
        %v1815 = vadd.f32 %v1654, %v1814
        %v1816 = vpop.f32.mrf.mxu0
        %v1817 = vpop.f32.mrf.mxu0
        %v1818 = vadd.f32 %v1657, %v1817
        %v1819 = vpop.f32.mrf.mxu0
        %1820 = vmatprep.mubr.bf16.mxu0 %v990
        %1821 = vmatmul.mubr.bf16.gmra.mxu0 %v989
        %v1822 = vpop.f32.mrf.mxu0
        %v1823 = vadd.f32 %v1662, %v1822
        %v1824 = vpop.f32.mrf.mxu0
        %v1825 = vpop.f32.mrf.mxu0
        %v1826 = vadd.f32 %v1665, %v1825
        %v1827 = vpop.f32.mrf.mxu0
        %1828 = vmatprep.mubr.bf16.mxu0 %v998
        %1829 = vmatmul.mubr.bf16.gmra.mxu0 %v997
        %v1830 = vpop.f32.mrf.mxu0
        %v1831 = vadd.f32 %v1670, %v1830
        %v1832 = vpop.f32.mrf.mxu0
        %v1833 = vpop.f32.mrf.mxu0
        %v1834 = vadd.f32 %v1673, %v1833
        %v1835 = vpop.f32.mrf.mxu0
        %1836 = vmatprep.mubr.bf16.mxu0 %v1006
        %1837 = vmatmul.mubr.bf16.gmra.mxu0 %v1005
        %v1838 = vpop.f32.mrf.mxu0
        %v1839 = vadd.f32 %v1678, %v1838
        %v1840 = vpop.f32.mrf.mxu0
        %v1841 = vpop.f32.mrf.mxu0
        %v1842 = vadd.f32 %v1681, %v1841
        %v1843 = vpop.f32.mrf.mxu0
        %1844 = vmatprep.mubr.bf16.mxu0 %v1014
        %1845 = vmatmul.mubr.bf16.gmra.mxu0 %v1013
        %v1846 = vpop.f32.mrf.mxu0
        %v1847 = vadd.f32 %v1686, %v1846
        %v1848 = vpop.f32.mrf.mxu0
        %v1849 = vpop.f32.mrf.mxu0
        %v1850 = vadd.f32 %v1689, %v1849
        %v1851 = vpop.f32.mrf.mxu0
        %1852 = vmatprep.mubr.bf16.mxu0 %v1022
        %1853 = vmatmul.mubr.bf16.gmra.mxu0 %v1021
        %v1854 = vpop.f32.mrf.mxu0
        %v1855 = vadd.f32 %v1694, %v1854
        %v1856 = vpop.f32.mrf.mxu0
        %v1857 = vpop.f32.mrf.mxu0
        %v1858 = vadd.f32 %v1697, %v1857
        %v1859 = vpop.f32.mrf.mxu0
        %1860 = vmatprep.mubr.bf16.mxu0 %v1030
        %1861 = vmatmul.mubr.bf16.gmra.mxu0 %v1029
        %v1862 = vpop.f32.mrf.mxu0
        %v1863 = vadd.f32 %v1702, %v1862
        %v1864 = vpop.f32.mrf.mxu0
        %v1865 = vpop.f32.mrf.mxu0
        %v1866 = vadd.f32 %v1705, %v1865
        %v1867 = vpop.f32.mrf.mxu0
        %1868 = vmatprep.mubr.bf16.mxu0 %v1038
        %1869 = vmatmul.mubr.bf16.gmra.mxu0 %v1037
        %v1870 = vpop.f32.mrf.mxu0
        %v1871 = vadd.f32 %v1710, %v1870
        %v1872 = vpop.f32.mrf.mxu0
        %v1873 = vpop.f32.mrf.mxu0
        %v1874 = vadd.f32 %v1713, %v1873
        %v1875 = vpop.f32.mrf.mxu0
        %1876 = vmatprep.mubr.bf16.mxu0 %v1046
        %1877 = vmatmul.mubr.bf16.gmra.mxu0 %v1045
        %v1878 = vpop.f32.mrf.mxu0
        %v1879 = vadd.f32 %v1718, %v1878
        %v1880 = vpop.f32.mrf.mxu0
        %v1881 = vpop.f32.mrf.mxu0
        %v1882 = vadd.f32 %v1721, %v1881
        %v1883 = vpop.f32.mrf.mxu0
        %1884 = vdwg.mxu0
        %1885 = vmatprep.subr.bf16.mxu0 0
        %1886 = vmatpush1.bf16.msra.mxu0 %v1474
        %1887 = vmatprep.subr.bf16.mxu0 0
        %1888 = vmatpush1.bf16.msra.mxu0 %v1473
        %1889 = vmatprep.subr.bf16.mxu0 0
        %1890 = vmatpush1.bf16.msra.mxu0 %v1472
        %1891 = vmatprep.subr.bf16.mxu0 0
        %1892 = vmatpush1.bf16.msra.mxu0 %v1471
        %1893 = vmatprep.subr.bf16.mxu0 0
        %1894 = vmatpush1.bf16.msra.mxu0 %v1470
        %1895 = vmatprep.subr.bf16.mxu0 0
        %1896 = vmatpush1.bf16.msra.mxu0 %v1469
        %1897 = vmatprep.subr.bf16.mxu0 0
        %1898 = vmatpush1.bf16.msra.mxu0 %v1468
        %1899 = vmatprep.subr.bf16.mxu0 0
        %1900 = vmatpush1.bf16.msra.mxu0 %v1467
        %1901 = vmatprep.subr.bf16.mxu0 0
        %1902 = vmatpush2.bf16.msra.mxu0 %v1482
        %1903 = vmatprep.subr.bf16.mxu0 0
        %1904 = vmatpush2.bf16.msra.mxu0 %v1481
        %1905 = vmatprep.subr.bf16.mxu0 0
        %1906 = vmatpush2.bf16.msra.mxu0 %v1480
        %1907 = vmatprep.subr.bf16.mxu0 0
        %1908 = vmatpush2.bf16.msra.mxu0 %v1479
        %1909 = vmatprep.subr.bf16.mxu0 0
        %1910 = vmatpush2.bf16.msra.mxu0 %v1478
        %1911 = vmatprep.subr.bf16.mxu0 0
        %1912 = vmatpush2.bf16.msra.mxu0 %v1477
        %1913 = vmatprep.subr.bf16.mxu0 0
        %1914 = vmatpush2.bf16.msra.mxu0 %v1476
        %1915 = vmatprep.subr.bf16.mxu0 0
        %1916 = vmatpush2.bf16.msra.mxu0 %v1475
        %1917 = vmatprep.mubr.bf16.mxu0 %v928
        %1918 = vmatmul.mubr.bf16.gmra.mxu0 %v927
        %v1919 = vpop.f32.mrf.mxu0
        %v1920 = vadd.f32 %v1759, %v1919
        %v1921 = vpop.f32.mrf.mxu0
        %v1922 = vpop.f32.mrf.mxu0
        %v1923 = vadd.f32 %v1762, %v1922
        %v1924 = vpop.f32.mrf.mxu0
        %1925 = vmatprep.mubr.bf16.mxu0 %v936
        %1926 = vmatmul.mubr.bf16.gmra.mxu0 %v935
        %v1927 = vpop.f32.mrf.mxu0
        %v1928 = vadd.f32 %v1767, %v1927
        %v1929 = vpop.f32.mrf.mxu0
        %v1930 = vpop.f32.mrf.mxu0
        %v1931 = vadd.f32 %v1770, %v1930
        %v1932 = vpop.f32.mrf.mxu0
        %1933 = vmatprep.mubr.bf16.mxu0 %v944
        %1934 = vmatmul.mubr.bf16.gmra.mxu0 %v943
        %v1935 = vpop.f32.mrf.mxu0
        %v1936 = vadd.f32 %v1775, %v1935
        %v1937 = vpop.f32.mrf.mxu0
        %v1938 = vpop.f32.mrf.mxu0
        %v1939 = vadd.f32 %v1778, %v1938
        %v1940 = vpop.f32.mrf.mxu0
        %1941 = vmatprep.mubr.bf16.mxu0 %v952
        %1942 = vmatmul.mubr.bf16.gmra.mxu0 %v951
        %v1943 = vpop.f32.mrf.mxu0
        %v1944 = vadd.f32 %v1783, %v1943
        %v1945 = vpop.f32.mrf.mxu0
        %v1946 = vpop.f32.mrf.mxu0
        %v1947 = vadd.f32 %v1786, %v1946
        %v1948 = vpop.f32.mrf.mxu0
        %1949 = vmatprep.mubr.bf16.mxu0 %v960
        %1950 = vmatmul.mubr.bf16.gmra.mxu0 %v959
        %v1951 = vpop.f32.mrf.mxu0
        %v1952 = vadd.f32 %v1791, %v1951
        %v1953 = vpop.f32.mrf.mxu0
        %v1954 = vpop.f32.mrf.mxu0
        %v1955 = vadd.f32 %v1794, %v1954
        %v1956 = vpop.f32.mrf.mxu0
        %1957 = vmatprep.mubr.bf16.mxu0 %v968
        %1958 = vmatmul.mubr.bf16.gmra.mxu0 %v967
        %v1959 = vpop.f32.mrf.mxu0
        %v1960 = vadd.f32 %v1799, %v1959
        %v1961 = vpop.f32.mrf.mxu0
        %v1962 = vpop.f32.mrf.mxu0
        %v1963 = vadd.f32 %v1802, %v1962
        %v1964 = vpop.f32.mrf.mxu0
        %1965 = vmatprep.mubr.bf16.mxu0 %v976
        %1966 = vmatmul.mubr.bf16.gmra.mxu0 %v975
        %v1967 = vpop.f32.mrf.mxu0
        %v1968 = vadd.f32 %v1807, %v1967
        %v1969 = vpop.f32.mrf.mxu0
        %v1970 = vpop.f32.mrf.mxu0
        %v1971 = vadd.f32 %v1810, %v1970
        %v1972 = vpop.f32.mrf.mxu0
        %1973 = vmatprep.mubr.bf16.mxu0 %v984
        %1974 = vmatmul.mubr.bf16.gmra.mxu0 %v983
        %v1975 = vpop.f32.mrf.mxu0
        %v1976 = vadd.f32 %v1815, %v1975
        %v1977 = vpop.f32.mrf.mxu0
        %v1978 = vpop.f32.mrf.mxu0
        %v1979 = vadd.f32 %v1818, %v1978
        %v1980 = vpop.f32.mrf.mxu0
        %1981 = vmatprep.mubr.bf16.mxu0 %v992
        %1982 = vmatmul.mubr.bf16.gmra.mxu0 %v991
        %v1983 = vpop.f32.mrf.mxu0
        %v1984 = vadd.f32 %v1823, %v1983
        %v1985 = vpop.f32.mrf.mxu0
        %v1986 = vpop.f32.mrf.mxu0
        %v1987 = vadd.f32 %v1826, %v1986
        %v1988 = vpop.f32.mrf.mxu0
        %1989 = vmatprep.mubr.bf16.mxu0 %v1000
        %1990 = vmatmul.mubr.bf16.gmra.mxu0 %v999
        %v1991 = vpop.f32.mrf.mxu0
        %v1992 = vadd.f32 %v1831, %v1991
        %v1993 = vpop.f32.mrf.mxu0
        %v1994 = vpop.f32.mrf.mxu0
        %v1995 = vadd.f32 %v1834, %v1994
        %v1996 = vpop.f32.mrf.mxu0
        %1997 = vmatprep.mubr.bf16.mxu0 %v1008
        %1998 = vmatmul.mubr.bf16.gmra.mxu0 %v1007
        %v1999 = vpop.f32.mrf.mxu0
        %v2000 = vadd.f32 %v1839, %v1999
        %v2001 = vpop.f32.mrf.mxu0
        %v2002 = vpop.f32.mrf.mxu0
        %v2003 = vadd.f32 %v1842, %v2002
        %v2004 = vpop.f32.mrf.mxu0
        %2005 = vmatprep.mubr.bf16.mxu0 %v1016
        %2006 = vmatmul.mubr.bf16.gmra.mxu0 %v1015
        %v2007 = vpop.f32.mrf.mxu0
        %v2008 = vadd.f32 %v1847, %v2007
        %v2009 = vpop.f32.mrf.mxu0
        %v2010 = vpop.f32.mrf.mxu0
        %v2011 = vadd.f32 %v1850, %v2010
        %v2012 = vpop.f32.mrf.mxu0
        %2013 = vmatprep.mubr.bf16.mxu0 %v1024
        %2014 = vmatmul.mubr.bf16.gmra.mxu0 %v1023
        %v2015 = vpop.f32.mrf.mxu0
        %v2016 = vadd.f32 %v1855, %v2015
        %v2017 = vpop.f32.mrf.mxu0
        %v2018 = vpop.f32.mrf.mxu0
        %v2019 = vadd.f32 %v1858, %v2018
        %v2020 = vpop.f32.mrf.mxu0
        %2021 = vmatprep.mubr.bf16.mxu0 %v1032
        %2022 = vmatmul.mubr.bf16.gmra.mxu0 %v1031
        %v2023 = vpop.f32.mrf.mxu0
        %v2024 = vadd.f32 %v1863, %v2023
        %v2025 = vpop.f32.mrf.mxu0
        %v2026 = vpop.f32.mrf.mxu0
        %v2027 = vadd.f32 %v1866, %v2026
        %v2028 = vpop.f32.mrf.mxu0
        %2029 = vmatprep.mubr.bf16.mxu0 %v1040
        %2030 = vmatmul.mubr.bf16.gmra.mxu0 %v1039
        %v2031 = vpop.f32.mrf.mxu0
        %v2032 = vadd.f32 %v1871, %v2031
        %v2033 = vpop.f32.mrf.mxu0
        %v2034 = vpop.f32.mrf.mxu0
        %v2035 = vadd.f32 %v1874, %v2034
        %v2036 = vpop.f32.mrf.mxu0
        %2037 = vmatprep.mubr.bf16.mxu0 %v1048
        %2038 = vmatmul.mubr.bf16.gmra.mxu0 %v1047
        %v2039 = vpop.f32.mrf.mxu0
        %v2040 = vadd.f32 %v1879, %v2039
        %v2041 = vpop.f32.mrf.mxu0
        %v2042 = vpop.f32.mrf.mxu0
        %v2043 = vadd.f32 %v1882, %v2042
        %v2044 = vpop.f32.mrf.mxu0
        %2045 = vdwg.mxu0
        %2046 = vmatprep.subr.bf16.mxu0 0
        %2047 = vmatpush1.bf16.msra.mxu0 %v1490
        %2048 = vmatprep.subr.bf16.mxu0 0
        %2049 = vmatpush1.bf16.msra.mxu0 %v1489
        %2050 = vmatprep.subr.bf16.mxu0 0
        %2051 = vmatpush1.bf16.msra.mxu0 %v1488
        %2052 = vmatprep.subr.bf16.mxu0 0
        %2053 = vmatpush1.bf16.msra.mxu0 %v1487
        %2054 = vmatprep.subr.bf16.mxu0 0
        %2055 = vmatpush1.bf16.msra.mxu0 %v1486
        %2056 = vmatprep.subr.bf16.mxu0 0
        %2057 = vmatpush1.bf16.msra.mxu0 %v1485
        %2058 = vmatprep.subr.bf16.mxu0 0
        %2059 = vmatpush1.bf16.msra.mxu0 %v1484
        %2060 = vmatprep.subr.bf16.mxu0 0
        %2061 = vmatpush1.bf16.msra.mxu0 %v1483
        %2062 = vmatprep.subr.bf16.mxu0 0
        %2063 = vmatpush2.bf16.msra.mxu0 %v1498
        %2064 = vmatprep.subr.bf16.mxu0 0
        %2065 = vmatpush2.bf16.msra.mxu0 %v1497
        %2066 = vmatprep.subr.bf16.mxu0 0
        %2067 = vmatpush2.bf16.msra.mxu0 %v1496
        %2068 = vmatprep.subr.bf16.mxu0 0
        %2069 = vmatpush2.bf16.msra.mxu0 %v1495
        %2070 = vmatprep.subr.bf16.mxu0 0
        %2071 = vmatpush2.bf16.msra.mxu0 %v1494
        %2072 = vmatprep.subr.bf16.mxu0 0
        %2073 = vmatpush2.bf16.msra.mxu0 %v1493
        %2074 = vmatprep.subr.bf16.mxu0 0
        %2075 = vmatpush2.bf16.msra.mxu0 %v1492
        %2076 = vmatprep.subr.bf16.mxu0 0
        %2077 = vmatpush2.bf16.msra.mxu0 %v1491
        %2078 = vmatprep.mubr.bf16.mxu0 %v930
        %2079 = vmatmul.mubr.bf16.gmra.mxu0 %v929
        %v2080 = vpop.f32.mrf.mxu0
        %v2081 = vadd.f32 %v1920, %v2080
        %v2082 = vpop.f32.mrf.mxu0
        %v2083 = vpop.f32.mrf.mxu0
        %v2084 = vadd.f32 %v1923, %v2083
        %v2085 = vpop.f32.mrf.mxu0
        %2086 = vmatprep.mubr.bf16.mxu0 %v938
        %2087 = vmatmul.mubr.bf16.gmra.mxu0 %v937
        %v2088 = vpop.f32.mrf.mxu0
        %v2089 = vadd.f32 %v1928, %v2088
        %v2090 = vpop.f32.mrf.mxu0
        %v2091 = vpop.f32.mrf.mxu0
        %v2092 = vadd.f32 %v1931, %v2091
        %v2093 = vpop.f32.mrf.mxu0
        %2094 = vmatprep.mubr.bf16.mxu0 %v946
        %2095 = vmatmul.mubr.bf16.gmra.mxu0 %v945
        %v2096 = vpop.f32.mrf.mxu0
        %v2097 = vadd.f32 %v1936, %v2096
        %v2098 = vpop.f32.mrf.mxu0
        %v2099 = vpop.f32.mrf.mxu0
        %v2100 = vadd.f32 %v1939, %v2099
        %v2101 = vpop.f32.mrf.mxu0
        %2102 = vmatprep.mubr.bf16.mxu0 %v954
        %2103 = vmatmul.mubr.bf16.gmra.mxu0 %v953
        %v2104 = vpop.f32.mrf.mxu0
        %v2105 = vadd.f32 %v1944, %v2104
        %v2106 = vpop.f32.mrf.mxu0
        %v2107 = vpop.f32.mrf.mxu0
        %v2108 = vadd.f32 %v1947, %v2107
        %v2109 = vpop.f32.mrf.mxu0
        %2110 = vmatprep.mubr.bf16.mxu0 %v962
        %2111 = vmatmul.mubr.bf16.gmra.mxu0 %v961
        %v2112 = vpop.f32.mrf.mxu0
        %v2113 = vadd.f32 %v1952, %v2112
        %v2114 = vpop.f32.mrf.mxu0
        %v2115 = vpop.f32.mrf.mxu0
        %v2116 = vadd.f32 %v1955, %v2115
        %v2117 = vpop.f32.mrf.mxu0
        %2118 = vmatprep.mubr.bf16.mxu0 %v970
        %2119 = vmatmul.mubr.bf16.gmra.mxu0 %v969
        %v2120 = vpop.f32.mrf.mxu0
        %v2121 = vadd.f32 %v1960, %v2120
        %v2122 = vpop.f32.mrf.mxu0
        %v2123 = vpop.f32.mrf.mxu0
        %v2124 = vadd.f32 %v1963, %v2123
        %v2125 = vpop.f32.mrf.mxu0
        %2126 = vmatprep.mubr.bf16.mxu0 %v978
        %2127 = vmatmul.mubr.bf16.gmra.mxu0 %v977
        %v2128 = vpop.f32.mrf.mxu0
        %v2129 = vadd.f32 %v1968, %v2128
        %v2130 = vpop.f32.mrf.mxu0
        %v2131 = vpop.f32.mrf.mxu0
        %v2132 = vadd.f32 %v1971, %v2131
        %v2133 = vpop.f32.mrf.mxu0
        %2134 = vmatprep.mubr.bf16.mxu0 %v986
        %2135 = vmatmul.mubr.bf16.gmra.mxu0 %v985
        %v2136 = vpop.f32.mrf.mxu0
        %v2137 = vadd.f32 %v1976, %v2136
        %v2138 = vpop.f32.mrf.mxu0
        %v2139 = vpop.f32.mrf.mxu0
        %v2140 = vadd.f32 %v1979, %v2139
        %v2141 = vpop.f32.mrf.mxu0
        %2142 = vmatprep.mubr.bf16.mxu0 %v994
        %2143 = vmatmul.mubr.bf16.gmra.mxu0 %v993
        %v2144 = vpop.f32.mrf.mxu0
        %v2145 = vadd.f32 %v1984, %v2144
        %v2146 = vpop.f32.mrf.mxu0
        %v2147 = vpop.f32.mrf.mxu0
        %v2148 = vadd.f32 %v1987, %v2147
        %v2149 = vpop.f32.mrf.mxu0
        %2150 = vmatprep.mubr.bf16.mxu0 %v1002
        %2151 = vmatmul.mubr.bf16.gmra.mxu0 %v1001
        %v2152 = vpop.f32.mrf.mxu0
        %v2153 = vadd.f32 %v1992, %v2152
        %v2154 = vpop.f32.mrf.mxu0
        %v2155 = vpop.f32.mrf.mxu0
        %v2156 = vadd.f32 %v1995, %v2155
        %v2157 = vpop.f32.mrf.mxu0
        %2158 = vmatprep.mubr.bf16.mxu0 %v1010
        %2159 = vmatmul.mubr.bf16.gmra.mxu0 %v1009
        %v2160 = vpop.f32.mrf.mxu0
        %v2161 = vadd.f32 %v2000, %v2160
        %v2162 = vpop.f32.mrf.mxu0
        %v2163 = vpop.f32.mrf.mxu0
        %v2164 = vadd.f32 %v2003, %v2163
        %v2165 = vpop.f32.mrf.mxu0
        %2166 = vmatprep.mubr.bf16.mxu0 %v1018
        %2167 = vmatmul.mubr.bf16.gmra.mxu0 %v1017
        %v2168 = vpop.f32.mrf.mxu0
        %v2169 = vadd.f32 %v2008, %v2168
        %v2170 = vpop.f32.mrf.mxu0
        %v2171 = vpop.f32.mrf.mxu0
        %v2172 = vadd.f32 %v2011, %v2171
        %v2173 = vpop.f32.mrf.mxu0
        %2174 = vmatprep.mubr.bf16.mxu0 %v1026
        %2175 = vmatmul.mubr.bf16.gmra.mxu0 %v1025
        %v2176 = vpop.f32.mrf.mxu0
        %v2177 = vadd.f32 %v2016, %v2176
        %v2178 = vpop.f32.mrf.mxu0
        %v2179 = vpop.f32.mrf.mxu0
        %v2180 = vadd.f32 %v2019, %v2179
        %v2181 = vpop.f32.mrf.mxu0
        %2182 = vmatprep.mubr.bf16.mxu0 %v1034
        %2183 = vmatmul.mubr.bf16.gmra.mxu0 %v1033
        %v2184 = vpop.f32.mrf.mxu0
        %v2185 = vadd.f32 %v2024, %v2184
        %v2186 = vpop.f32.mrf.mxu0
        %v2187 = vpop.f32.mrf.mxu0
        %v2188 = vadd.f32 %v2027, %v2187
        %v2189 = vpop.f32.mrf.mxu0
        %2190 = vmatprep.mubr.bf16.mxu0 %v1042
        %2191 = vmatmul.mubr.bf16.gmra.mxu0 %v1041
        %v2192 = vpop.f32.mrf.mxu0
        %v2193 = vadd.f32 %v2032, %v2192
        %v2194 = vpop.f32.mrf.mxu0
        %v2195 = vpop.f32.mrf.mxu0
        %v2196 = vadd.f32 %v2035, %v2195
        %v2197 = vpop.f32.mrf.mxu0
        %2198 = vmatprep.mubr.bf16.mxu0 %v1050
        %2199 = vmatmul.mubr.bf16.gmra.mxu0 %v1049
        %v2200 = vpop.f32.mrf.mxu0
        %v2201 = vadd.f32 %v2040, %v2200
        %v2202 = vpop.f32.mrf.mxu0
        %v2203 = vpop.f32.mrf.mxu0
        %v2204 = vadd.f32 %v2043, %v2203
        %v2205 = vpop.f32.mrf.mxu0
        %2206 = vdwg.mxu0
        %v2207 = vadd.f32 %v507, %v2081
        %v2208 = vadd.f32 %v508, %v2084
        %v2209 = vadd.f32 %v509, %v2089
        %v2210 = vadd.f32 %v510, %v2092
        %v2211 = vadd.f32 %v511, %v2097
        %v2212 = vadd.f32 %v512, %v2100
        %v2213 = vadd.f32 %v513, %v2105
        %v2214 = vadd.f32 %v514, %v2108
        %v2215 = vadd.f32 %v515, %v2113
        %v2216 = vadd.f32 %v516, %v2116
        %v2217 = vadd.f32 %v517, %v2121
        %v2218 = vadd.f32 %v518, %v2124
        %v2219 = vadd.f32 %v519, %v2129
        %v2220 = vadd.f32 %v520, %v2132
        %v2221 = vadd.f32 %v521, %v2137
        %v2222 = vadd.f32 %v522, %v2140
        %v2223 = vadd.f32 %v523, %v2145
        %v2224 = vadd.f32 %v524, %v2148
        %v2225 = vadd.f32 %v525, %v2153
        %v2226 = vadd.f32 %v526, %v2156
        %v2227 = vadd.f32 %v527, %v2161
        %v2228 = vadd.f32 %v528, %v2164
        %v2229 = vadd.f32 %v529, %v2169
        %v2230 = vadd.f32 %v530, %v2172
        %v2231 = vadd.f32 %v531, %v2177
        %v2232 = vadd.f32 %v532, %v2180
        %v2233 = vadd.f32 %v533, %v2185
        %v2234 = vadd.f32 %v534, %v2188
        %v2235 = vadd.f32 %v535, %v2193
        %v2236 = vadd.f32 %v536, %v2196
        %v2237 = vadd.f32 %v537, %v2201
        %v2238 = vadd.f32 %v538, %v2204
        %2239 = vst [vmem:[%s162] sm:$0xff] %v2207
        %2240 = vst [vmem:[%s162 + $0x8] sm:$0xff] %v2208
        %2241 = vst [vmem:[%s162 + $0x10] sm:$0xff] %v2209
        %2242 = vst [vmem:[%s162 + $0x18] sm:$0xff] %v2210
        %2243 = vst [vmem:[%s162 + $0x20] sm:$0xff] %v2211
        %2244 = vst [vmem:[%s162 + $0x28] sm:$0xff] %v2212
        %2245 = vst [vmem:[%s162 + $0x30] sm:$0xff] %v2213
        %2246 = vst [vmem:[%s162 + $0x38] sm:$0xff] %v2214
        %2247 = vst [vmem:[%s162 + $0x40] sm:$0xff] %v2215
        %2248 = vst [vmem:[%s162 + $0x48] sm:$0xff] %v2216
        %2249 = vst [vmem:[%s162 + $0x50] sm:$0xff] %v2217
        %2250 = vst [vmem:[%s162 + $0x58] sm:$0xff] %v2218
        %2251 = vst [vmem:[%s162 + $0x60] sm:$0xff] %v2219
        %2252 = vst [vmem:[%s162 + $0x68] sm:$0xff] %v2220
        %2253 = vst [vmem:[%s162 + $0x70] sm:$0xff] %v2221
        %2254 = vst [vmem:[%s162 + $0x78] sm:$0xff] %v2222
        %2255 = vst [vmem:[%s162 + $0x80] sm:$0xff] %v2223
        %2256 = vst [vmem:[%s162 + $0x88] sm:$0xff] %v2224
        %2257 = vst [vmem:[%s162 + $0x90] sm:$0xff] %v2225
        %2258 = vst [vmem:[%s162 + $0x98] sm:$0xff] %v2226
        %2259 = vst [vmem:[%s162 + $0xa0] sm:$0xff] %v2227
        %2260 = vst [vmem:[%s162 + $0xa8] sm:$0xff] %v2228
        %2261 = vst [vmem:[%s162 + $0xb0] sm:$0xff] %v2229
        %2262 = vst [vmem:[%s162 + $0xb8] sm:$0xff] %v2230
        %2263 = vst [vmem:[%s162 + $0xc0] sm:$0xff] %v2231
        %2264 = vst [vmem:[%s162 + $0xc8] sm:$0xff] %v2232
        %2265 = vst [vmem:[%s162 + $0xd0] sm:$0xff] %v2233
        %2266 = vst [vmem:[%s162 + $0xd8] sm:$0xff] %v2234
        %2267 = vst [vmem:[%s162 + $0xe0] sm:$0xff] %v2235
        %2268 = vst [vmem:[%s162 + $0xe8] sm:$0xff] %v2236
        %2269 = vst [vmem:[%s162 + $0xf0] sm:$0xff] %v2237
        %2270 = vst [vmem:[%s162 + $0xf8] sm:$0xff] %v2238
        %v2271 = vld [vmem:[#allocation2] sm:$0xff]
        %v2272 = vld [vmem:[#allocation2 + $0x8] sm:$0xff]
        %v2273 = vld [vmem:[#allocation2 + $0x10] sm:$0xff]
        %v2274 = vld [vmem:[#allocation2 + $0x18] sm:$0xff]
        %v2275 = vld [vmem:[#allocation2 + $0x20] sm:$0xff]
        %v2276 = vld [vmem:[#allocation2 + $0x28] sm:$0xff]
        %v2277 = vld [vmem:[#allocation2 + $0x30] sm:$0xff]
        %v2278 = vld [vmem:[#allocation2 + $0x38] sm:$0xff]
        %v2279 = vld [vmem:[#allocation2 + $0x40] sm:$0xff]
        %v2280 = vld [vmem:[#allocation2 + $0x48] sm:$0xff]
        %v2281 = vld [vmem:[#allocation2 + $0x50] sm:$0xff]
        %v2282 = vld [vmem:[#allocation2 + $0x58] sm:$0xff]
        %v2283 = vld [vmem:[#allocation2 + $0x60] sm:$0xff]
        %v2284 = vld [vmem:[#allocation2 + $0x68] sm:$0xff]
        %v2285 = vld [vmem:[#allocation2 + $0x70] sm:$0xff]
        %v2286 = vld [vmem:[#allocation2 + $0x78] sm:$0xff]
        %v2287 = vld [vmem:[#allocation2 + $0x80] sm:$0xff]
        %v2288 = vld [vmem:[#allocation2 + $0x88] sm:$0xff]
        %v2289 = vld [vmem:[#allocation2 + $0x90] sm:$0xff]
        %v2290 = vld [vmem:[#allocation2 + $0x98] sm:$0xff]
        %v2291 = vld [vmem:[#allocation2 + $0xa0] sm:$0xff]
        %v2292 = vld [vmem:[#allocation2 + $0xa8] sm:$0xff]
        %v2293 = vld [vmem:[#allocation2 + $0xb0] sm:$0xff]
        %v2294 = vld [vmem:[#allocation2 + $0xb8] sm:$0xff]
        %v2295 = vld [vmem:[#allocation2 + $0xc0] sm:$0xff]
        %v2296 = vld [vmem:[#allocation2 + $0xc8] sm:$0xff]
        %v2297 = vld [vmem:[#allocation2 + $0xd0] sm:$0xff]
        %v2298 = vld [vmem:[#allocation2 + $0xd8] sm:$0xff]
        %v2299 = vld [vmem:[#allocation2 + $0xe0] sm:$0xff]
        %v2300 = vld [vmem:[#allocation2 + $0xe8] sm:$0xff]
        %v2301 = vld [vmem:[#allocation2 + $0xf0] sm:$0xff]
        %v2302 = vld [vmem:[#allocation2 + $0xf8] sm:$0xff]
        %v2303 = vunpack.c.l.bf16 %v246
        %v2304 = vunpack.c.h.bf16 %v246
        %v2305 = vunpack.c.l.bf16 %v247
        %v2306 = vunpack.c.h.bf16 %v247
        %v2307 = vunpack.c.l.bf16 %v248
        %v2308 = vunpack.c.h.bf16 %v248
        %v2309 = vunpack.c.l.bf16 %v249
        %v2310 = vunpack.c.h.bf16 %v249
        %v2311 = vunpack.c.l.bf16 %v250
        %v2312 = vunpack.c.h.bf16 %v250
        %v2313 = vunpack.c.l.bf16 %v251
        %v2314 = vunpack.c.h.bf16 %v251
        %v2315 = vunpack.c.l.bf16 %v252
        %v2316 = vunpack.c.h.bf16 %v252
        %v2317 = vunpack.c.l.bf16 %v253
        %v2318 = vunpack.c.h.bf16 %v253
        %v2319 = vunpack.c.l.bf16 %v254
        %v2320 = vunpack.c.h.bf16 %v254
        %v2321 = vunpack.c.l.bf16 %v255
        %v2322 = vunpack.c.h.bf16 %v255
        %v2323 = vunpack.c.l.bf16 %v256
        %v2324 = vunpack.c.h.bf16 %v256
        %v2325 = vunpack.c.l.bf16 %v257
        %v2326 = vunpack.c.h.bf16 %v257
        %v2327 = vunpack.c.l.bf16 %v258
        %v2328 = vunpack.c.h.bf16 %v258
        %v2329 = vunpack.c.l.bf16 %v259
        %v2330 = vunpack.c.h.bf16 %v259
        %v2331 = vunpack.c.l.bf16 %v260
        %v2332 = vunpack.c.h.bf16 %v260
        %v2333 = vunpack.c.l.bf16 %v261
        %v2334 = vunpack.c.h.bf16 %v261
        %v2335 = vunpack.c.l.bf16 %v262
        %v2336 = vunpack.c.h.bf16 %v262
        %v2337 = vunpack.c.l.bf16 %v263
        %v2338 = vunpack.c.h.bf16 %v263
        %v2339 = vunpack.c.l.bf16 %v264
        %v2340 = vunpack.c.h.bf16 %v264
        %v2341 = vunpack.c.l.bf16 %v265
        %v2342 = vunpack.c.h.bf16 %v265
        %v2343 = vunpack.c.l.bf16 %v266
        %v2344 = vunpack.c.h.bf16 %v266
        %v2345 = vunpack.c.l.bf16 %v267
        %v2346 = vunpack.c.h.bf16 %v267
        %v2347 = vunpack.c.l.bf16 %v268
        %v2348 = vunpack.c.h.bf16 %v268
        %v2349 = vunpack.c.l.bf16 %v269
        %v2350 = vunpack.c.h.bf16 %v269
        %v2351 = vunpack.c.l.bf16 %v270
        %v2352 = vunpack.c.h.bf16 %v270
        %v2353 = vunpack.c.l.bf16 %v271
        %v2354 = vunpack.c.h.bf16 %v271
        %v2355 = vunpack.c.l.bf16 %v272
        %v2356 = vunpack.c.h.bf16 %v272
        %v2357 = vunpack.c.l.bf16 %v273
        %v2358 = vunpack.c.h.bf16 %v273
        %v2359 = vunpack.c.l.bf16 %v274
        %v2360 = vunpack.c.h.bf16 %v274
        %v2361 = vunpack.c.l.bf16 %v275
        %v2362 = vunpack.c.h.bf16 %v275
        %v2363 = vunpack.c.l.bf16 %v276
        %v2364 = vunpack.c.h.bf16 %v276
        %v2365 = vunpack.c.l.bf16 %v277
        %v2366 = vunpack.c.h.bf16 %v277
        %v2367 = vunpack.c.l.bf16 %v278
        %v2368 = vunpack.c.h.bf16 %v278
        %v2369 = vunpack.c.l.bf16 %v279
        %v2370 = vunpack.c.h.bf16 %v279
        %v2371 = vunpack.c.l.bf16 %v280
        %v2372 = vunpack.c.h.bf16 %v280
        %v2373 = vunpack.c.l.bf16 %v281
        %v2374 = vunpack.c.h.bf16 %v281
        %v2375 = vunpack.c.l.bf16 %v282
        %v2376 = vunpack.c.h.bf16 %v282
        %v2377 = vunpack.c.l.bf16 %v283
        %v2378 = vunpack.c.h.bf16 %v283
        %v2379 = vunpack.c.l.bf16 %v284
        %v2380 = vunpack.c.h.bf16 %v284
        %v2381 = vunpack.c.l.bf16 %v285
        %v2382 = vunpack.c.h.bf16 %v285
        %v2383 = vunpack.c.l.bf16 %v286
        %v2384 = vunpack.c.h.bf16 %v286
        %v2385 = vunpack.c.l.bf16 %v287
        %v2386 = vunpack.c.h.bf16 %v287
        %v2387 = vunpack.c.l.bf16 %v288
        %v2388 = vunpack.c.h.bf16 %v288
        %v2389 = vunpack.c.l.bf16 %v289
        %v2390 = vunpack.c.h.bf16 %v289
        %v2391 = vunpack.c.l.bf16 %v290
        %v2392 = vunpack.c.h.bf16 %v290
        %v2393 = vunpack.c.l.bf16 %v291
        %v2394 = vunpack.c.h.bf16 %v291
        %v2395 = vunpack.c.l.bf16 %v292
        %v2396 = vunpack.c.h.bf16 %v292
        %v2397 = vunpack.c.l.bf16 %v293
        %v2398 = vunpack.c.h.bf16 %v293
        %v2399 = vunpack.c.l.bf16 %v294
        %v2400 = vunpack.c.h.bf16 %v294
        %v2401 = vunpack.c.l.bf16 %v295
        %v2402 = vunpack.c.h.bf16 %v295
        %v2403 = vunpack.c.l.bf16 %v296
        %v2404 = vunpack.c.h.bf16 %v296
        %v2405 = vunpack.c.l.bf16 %v297
        %v2406 = vunpack.c.h.bf16 %v297
        %v2407 = vunpack.c.l.bf16 %v298
        %v2408 = vunpack.c.h.bf16 %v298
        %v2409 = vunpack.c.l.bf16 %v299
        %v2410 = vunpack.c.h.bf16 %v299
        %v2411 = vunpack.c.l.bf16 %v300
        %v2412 = vunpack.c.h.bf16 %v300
        %v2413 = vunpack.c.l.bf16 %v301
        %v2414 = vunpack.c.h.bf16 %v301
        %v2415 = vunpack.c.l.bf16 %v302
        %v2416 = vunpack.c.h.bf16 %v302
        %v2417 = vunpack.c.l.bf16 %v303
        %v2418 = vunpack.c.h.bf16 %v303
        %v2419 = vunpack.c.l.bf16 %v304
        %v2420 = vunpack.c.h.bf16 %v304
        %v2421 = vunpack.c.l.bf16 %v305
        %v2422 = vunpack.c.h.bf16 %v305
        %v2423 = vunpack.c.l.bf16 %v306
        %v2424 = vunpack.c.h.bf16 %v306
        %v2425 = vunpack.c.l.bf16 %v307
        %v2426 = vunpack.c.h.bf16 %v307
        %v2427 = vunpack.c.l.bf16 %v308
        %v2428 = vunpack.c.h.bf16 %v308
        %v2429 = vunpack.c.l.bf16 %v309
        %v2430 = vunpack.c.h.bf16 %v309
        %v2431 = vunpack.c.l.bf16 %v310
        %v2432 = vunpack.c.h.bf16 %v310
        %v2433 = vunpack.c.l.bf16 %v311
        %v2434 = vunpack.c.h.bf16 %v311
        %v2435 = vunpack.c.l.bf16 %v312
        %v2436 = vunpack.c.h.bf16 %v312
        %v2437 = vunpack.c.l.bf16 %v313
        %v2438 = vunpack.c.h.bf16 %v313
        %v2439 = vunpack.c.l.bf16 %v314
        %v2440 = vunpack.c.h.bf16 %v314
        %v2441 = vunpack.c.l.bf16 %v315
        %v2442 = vunpack.c.h.bf16 %v315
        %v2443 = vunpack.c.l.bf16 %v316
        %v2444 = vunpack.c.h.bf16 %v316
        %v2445 = vunpack.c.l.bf16 %v317
        %v2446 = vunpack.c.h.bf16 %v317
        %v2447 = vunpack.c.l.bf16 %v318
        %v2448 = vunpack.c.h.bf16 %v318
        %v2449 = vunpack.c.l.bf16 %v319
        %v2450 = vunpack.c.h.bf16 %v319
        %v2451 = vunpack.c.l.bf16 %v320
        %v2452 = vunpack.c.h.bf16 %v320
        %v2453 = vunpack.c.l.bf16 %v321
        %v2454 = vunpack.c.h.bf16 %v321
        %v2455 = vunpack.c.l.bf16 %v322
        %v2456 = vunpack.c.h.bf16 %v322
        %v2457 = vunpack.c.l.bf16 %v323
        %v2458 = vunpack.c.h.bf16 %v323
        %v2459 = vunpack.c.l.bf16 %v324
        %v2460 = vunpack.c.h.bf16 %v324
        %v2461 = vunpack.c.l.bf16 %v325
        %v2462 = vunpack.c.h.bf16 %v325
        %v2463 = vunpack.c.l.bf16 %v326
        %v2464 = vunpack.c.h.bf16 %v326
        %v2465 = vunpack.c.l.bf16 %v327
        %v2466 = vunpack.c.h.bf16 %v327
        %v2467 = vunpack.c.l.bf16 %v328
        %v2468 = vunpack.c.h.bf16 %v328
        %v2469 = vunpack.c.l.bf16 %v329
        %v2470 = vunpack.c.h.bf16 %v329
        %v2471 = vunpack.c.l.bf16 %v330
        %v2472 = vunpack.c.h.bf16 %v330
        %v2473 = vunpack.c.l.bf16 %v331
        %v2474 = vunpack.c.h.bf16 %v331
        %v2475 = vunpack.c.l.bf16 %v332
        %v2476 = vunpack.c.h.bf16 %v332
        %v2477 = vunpack.c.l.bf16 %v333
        %v2478 = vunpack.c.h.bf16 %v333
        %v2479 = vunpack.c.l.bf16 %v334
        %v2480 = vunpack.c.h.bf16 %v334
        %v2481 = vunpack.c.l.bf16 %v335
        %v2482 = vunpack.c.h.bf16 %v335
        %v2483 = vunpack.c.l.bf16 %v336
        %v2484 = vunpack.c.h.bf16 %v336
        %v2485 = vunpack.c.l.bf16 %v337
        %v2486 = vunpack.c.h.bf16 %v337
        %v2487 = vunpack.c.l.bf16 %v338
        %v2488 = vunpack.c.h.bf16 %v338
        %v2489 = vunpack.c.l.bf16 %v339
        %v2490 = vunpack.c.h.bf16 %v339
        %v2491 = vunpack.c.l.bf16 %v340
        %v2492 = vunpack.c.h.bf16 %v340
        %v2493 = vunpack.c.l.bf16 %v341
        %v2494 = vunpack.c.h.bf16 %v341
        %v2495 = vunpack.c.l.bf16 %v342
        %v2496 = vunpack.c.h.bf16 %v342
        %v2497 = vunpack.c.l.bf16 %v343
        %v2498 = vunpack.c.h.bf16 %v343
        %v2499 = vunpack.c.l.bf16 %v344
        %v2500 = vunpack.c.h.bf16 %v344
        %v2501 = vunpack.c.l.bf16 %v345
        %v2502 = vunpack.c.h.bf16 %v345
        %v2503 = vunpack.c.l.bf16 %v346
        %v2504 = vunpack.c.h.bf16 %v346
        %v2505 = vunpack.c.l.bf16 %v347
        %v2506 = vunpack.c.h.bf16 %v347
        %v2507 = vunpack.c.l.bf16 %v348
        %v2508 = vunpack.c.h.bf16 %v348
        %v2509 = vunpack.c.l.bf16 %v349
        %v2510 = vunpack.c.h.bf16 %v349
        %v2511 = vunpack.c.l.bf16 %v350
        %v2512 = vunpack.c.h.bf16 %v350
        %v2513 = vunpack.c.l.bf16 %v351
        %v2514 = vunpack.c.h.bf16 %v351
        %v2515 = vunpack.c.l.bf16 %v352
        %v2516 = vunpack.c.h.bf16 %v352
        %v2517 = vunpack.c.l.bf16 %v353
        %v2518 = vunpack.c.h.bf16 %v353
        %v2519 = vunpack.c.l.bf16 %v354
        %v2520 = vunpack.c.h.bf16 %v354
        %v2521 = vunpack.c.l.bf16 %v355
        %v2522 = vunpack.c.h.bf16 %v355
        %v2523 = vunpack.c.l.bf16 %v356
        %v2524 = vunpack.c.h.bf16 %v356
        %v2525 = vunpack.c.l.bf16 %v357
        %v2526 = vunpack.c.h.bf16 %v357
        %v2527 = vunpack.c.l.bf16 %v358
        %v2528 = vunpack.c.h.bf16 %v358
        %v2529 = vunpack.c.l.bf16 %v359
        %v2530 = vunpack.c.h.bf16 %v359
        %v2531 = vunpack.c.l.bf16 %v360
        %v2532 = vunpack.c.h.bf16 %v360
        %v2533 = vunpack.c.l.bf16 %v361
        %v2534 = vunpack.c.h.bf16 %v361
        %v2535 = vunpack.c.l.bf16 %v362
        %v2536 = vunpack.c.h.bf16 %v362
        %v2537 = vunpack.c.l.bf16 %v363
        %v2538 = vunpack.c.h.bf16 %v363
        %v2539 = vunpack.c.l.bf16 %v364
        %v2540 = vunpack.c.h.bf16 %v364
        %v2541 = vunpack.c.l.bf16 %v365
        %v2542 = vunpack.c.h.bf16 %v365
        %v2543 = vunpack.c.l.bf16 %v366
        %v2544 = vunpack.c.h.bf16 %v366
        %v2545 = vunpack.c.l.bf16 %v367
        %v2546 = vunpack.c.h.bf16 %v367
        %v2547 = vunpack.c.l.bf16 %v368
        %v2548 = vunpack.c.h.bf16 %v368
        %v2549 = vunpack.c.l.bf16 %v369
        %v2550 = vunpack.c.h.bf16 %v369
        %v2551 = vunpack.c.l.bf16 %v370
        %v2552 = vunpack.c.h.bf16 %v370
        %v2553 = vunpack.c.l.bf16 %v371
        %v2554 = vunpack.c.h.bf16 %v371
        %v2555 = vunpack.c.l.bf16 %v372
        %v2556 = vunpack.c.h.bf16 %v372
        %v2557 = vunpack.c.l.bf16 %v373
        %v2558 = vunpack.c.h.bf16 %v373
        %v2559 = vadd.f32 %v2303, %v2304
        %v2560 = vadd.f32 %v2559, %v2305
        %v2561 = vadd.f32 %v2560, %v2306
        %v2562 = vadd.f32 %v2561, %v2307
        %v2563 = vadd.f32 %v2562, %v2308
        %v2564 = vadd.f32 %v2563, %v2309
        %v2565 = vadd.f32 %v2564, %v2310
        %2566 = vadd.xlane.f32.xlu0 %v2565
        %v2567 = vpop.xlane.xlu0 %2566
        %v2568 = vadd.f32 %v2311, %v2312
        %v2569 = vadd.f32 %v2568, %v2313
        %v2570 = vadd.f32 %v2569, %v2314
        %v2571 = vadd.f32 %v2570, %v2315
        %v2572 = vadd.f32 %v2571, %v2316
        %v2573 = vadd.f32 %v2572, %v2317
        %v2574 = vadd.f32 %v2573, %v2318
        %2575 = vadd.xlane.f32.xlu0 %v2574
        %v2576 = vpop.xlane.xlu0 %2575
        %v2577 = vadd.f32 %v2319, %v2320
        %v2578 = vadd.f32 %v2577, %v2321
        %v2579 = vadd.f32 %v2578, %v2322
        %v2580 = vadd.f32 %v2579, %v2323
        %v2581 = vadd.f32 %v2580, %v2324
        %v2582 = vadd.f32 %v2581, %v2325
        %v2583 = vadd.f32 %v2582, %v2326
        %2584 = vadd.xlane.f32.xlu0 %v2583
        %v2585 = vpop.xlane.xlu0 %2584
        %v2586 = vadd.f32 %v2327, %v2328
        %v2587 = vadd.f32 %v2586, %v2329
        %v2588 = vadd.f32 %v2587, %v2330
        %v2589 = vadd.f32 %v2588, %v2331
        %v2590 = vadd.f32 %v2589, %v2332
        %v2591 = vadd.f32 %v2590, %v2333
        %v2592 = vadd.f32 %v2591, %v2334
        %2593 = vadd.xlane.f32.xlu0 %v2592
        %v2594 = vpop.xlane.xlu0 %2593
        %v2595 = vadd.f32 %v2335, %v2336
        %v2596 = vadd.f32 %v2595, %v2337
        %v2597 = vadd.f32 %v2596, %v2338
        %v2598 = vadd.f32 %v2597, %v2339
        %v2599 = vadd.f32 %v2598, %v2340
        %v2600 = vadd.f32 %v2599, %v2341
        %v2601 = vadd.f32 %v2600, %v2342
        %2602 = vadd.xlane.f32.xlu0 %v2601
        %v2603 = vpop.xlane.xlu0 %2602
        %v2604 = vadd.f32 %v2343, %v2344
        %v2605 = vadd.f32 %v2604, %v2345
        %v2606 = vadd.f32 %v2605, %v2346
        %v2607 = vadd.f32 %v2606, %v2347
        %v2608 = vadd.f32 %v2607, %v2348
        %v2609 = vadd.f32 %v2608, %v2349
        %v2610 = vadd.f32 %v2609, %v2350
        %2611 = vadd.xlane.f32.xlu0 %v2610
        %v2612 = vpop.xlane.xlu0 %2611
        %v2613 = vadd.f32 %v2351, %v2352
        %v2614 = vadd.f32 %v2613, %v2353
        %v2615 = vadd.f32 %v2614, %v2354
        %v2616 = vadd.f32 %v2615, %v2355
        %v2617 = vadd.f32 %v2616, %v2356
        %v2618 = vadd.f32 %v2617, %v2357
        %v2619 = vadd.f32 %v2618, %v2358
        %2620 = vadd.xlane.f32.xlu0 %v2619
        %v2621 = vpop.xlane.xlu0 %2620
        %v2622 = vadd.f32 %v2359, %v2360
        %v2623 = vadd.f32 %v2622, %v2361
        %v2624 = vadd.f32 %v2623, %v2362
        %v2625 = vadd.f32 %v2624, %v2363
        %v2626 = vadd.f32 %v2625, %v2364
        %v2627 = vadd.f32 %v2626, %v2365
        %v2628 = vadd.f32 %v2627, %v2366
        %2629 = vadd.xlane.f32.xlu0 %v2628
        %v2630 = vpop.xlane.xlu0 %2629
        %v2631 = vadd.f32 %v2367, %v2368
        %v2632 = vadd.f32 %v2631, %v2369
        %v2633 = vadd.f32 %v2632, %v2370
        %v2634 = vadd.f32 %v2633, %v2371
        %v2635 = vadd.f32 %v2634, %v2372
        %v2636 = vadd.f32 %v2635, %v2373
        %v2637 = vadd.f32 %v2636, %v2374
        %2638 = vadd.xlane.f32.xlu0 %v2637
        %v2639 = vpop.xlane.xlu0 %2638
        %v2640 = vadd.f32 %v2375, %v2376
        %v2641 = vadd.f32 %v2640, %v2377
        %v2642 = vadd.f32 %v2641, %v2378
        %v2643 = vadd.f32 %v2642, %v2379
        %v2644 = vadd.f32 %v2643, %v2380
        %v2645 = vadd.f32 %v2644, %v2381
        %v2646 = vadd.f32 %v2645, %v2382
        %2647 = vadd.xlane.f32.xlu0 %v2646
        %v2648 = vpop.xlane.xlu0 %2647
        %v2649 = vadd.f32 %v2383, %v2384
        %v2650 = vadd.f32 %v2649, %v2385
        %v2651 = vadd.f32 %v2650, %v2386
        %v2652 = vadd.f32 %v2651, %v2387
        %v2653 = vadd.f32 %v2652, %v2388
        %v2654 = vadd.f32 %v2653, %v2389
        %v2655 = vadd.f32 %v2654, %v2390
        %2656 = vadd.xlane.f32.xlu0 %v2655
        %v2657 = vpop.xlane.xlu0 %2656
        %v2658 = vadd.f32 %v2391, %v2392
        %v2659 = vadd.f32 %v2658, %v2393
        %v2660 = vadd.f32 %v2659, %v2394
        %v2661 = vadd.f32 %v2660, %v2395
        %v2662 = vadd.f32 %v2661, %v2396
        %v2663 = vadd.f32 %v2662, %v2397
        %v2664 = vadd.f32 %v2663, %v2398
        %2665 = vadd.xlane.f32.xlu0 %v2664
        %v2666 = vpop.xlane.xlu0 %2665
        %v2667 = vadd.f32 %v2399, %v2400
        %v2668 = vadd.f32 %v2667, %v2401
        %v2669 = vadd.f32 %v2668, %v2402
        %v2670 = vadd.f32 %v2669, %v2403
        %v2671 = vadd.f32 %v2670, %v2404
        %v2672 = vadd.f32 %v2671, %v2405
        %v2673 = vadd.f32 %v2672, %v2406
        %2674 = vadd.xlane.f32.xlu0 %v2673
        %v2675 = vpop.xlane.xlu0 %2674
        %v2676 = vadd.f32 %v2407, %v2408
        %v2677 = vadd.f32 %v2676, %v2409
        %v2678 = vadd.f32 %v2677, %v2410
        %v2679 = vadd.f32 %v2678, %v2411
        %v2680 = vadd.f32 %v2679, %v2412
        %v2681 = vadd.f32 %v2680, %v2413
        %v2682 = vadd.f32 %v2681, %v2414
        %2683 = vadd.xlane.f32.xlu0 %v2682
        %v2684 = vpop.xlane.xlu0 %2683
        %v2685 = vadd.f32 %v2415, %v2416
        %v2686 = vadd.f32 %v2685, %v2417
        %v2687 = vadd.f32 %v2686, %v2418
        %v2688 = vadd.f32 %v2687, %v2419
        %v2689 = vadd.f32 %v2688, %v2420
        %v2690 = vadd.f32 %v2689, %v2421
        %v2691 = vadd.f32 %v2690, %v2422
        %2692 = vadd.xlane.f32.xlu0 %v2691
        %v2693 = vpop.xlane.xlu0 %2692
        %v2694 = vadd.f32 %v2423, %v2424
        %v2695 = vadd.f32 %v2694, %v2425
        %v2696 = vadd.f32 %v2695, %v2426
        %v2697 = vadd.f32 %v2696, %v2427
        %v2698 = vadd.f32 %v2697, %v2428
        %v2699 = vadd.f32 %v2698, %v2429
        %v2700 = vadd.f32 %v2699, %v2430
        %2701 = vadd.xlane.f32.xlu0 %v2700
        %v2702 = vpop.xlane.xlu0 %2701
        %v2703 = vadd.f32 %v2431, %v2432
        %v2704 = vadd.f32 %v2703, %v2433
        %v2705 = vadd.f32 %v2704, %v2434
        %v2706 = vadd.f32 %v2705, %v2435
        %v2707 = vadd.f32 %v2706, %v2436
        %v2708 = vadd.f32 %v2707, %v2437
        %v2709 = vadd.f32 %v2708, %v2438
        %2710 = vadd.xlane.f32.xlu0 %v2709
        %v2711 = vpop.xlane.xlu0 %2710
        %v2712 = vadd.f32 %v2439, %v2440
        %v2713 = vadd.f32 %v2712, %v2441
        %v2714 = vadd.f32 %v2713, %v2442
        %v2715 = vadd.f32 %v2714, %v2443
        %v2716 = vadd.f32 %v2715, %v2444
        %v2717 = vadd.f32 %v2716, %v2445
        %v2718 = vadd.f32 %v2717, %v2446
        %2719 = vadd.xlane.f32.xlu0 %v2718
        %v2720 = vpop.xlane.xlu0 %2719
        %v2721 = vadd.f32 %v2447, %v2448
        %v2722 = vadd.f32 %v2721, %v2449
        %v2723 = vadd.f32 %v2722, %v2450
        %v2724 = vadd.f32 %v2723, %v2451
        %v2725 = vadd.f32 %v2724, %v2452
        %v2726 = vadd.f32 %v2725, %v2453
        %v2727 = vadd.f32 %v2726, %v2454
        %2728 = vadd.xlane.f32.xlu0 %v2727
        %v2729 = vpop.xlane.xlu0 %2728
        %v2730 = vadd.f32 %v2455, %v2456
        %v2731 = vadd.f32 %v2730, %v2457
        %v2732 = vadd.f32 %v2731, %v2458
        %v2733 = vadd.f32 %v2732, %v2459
        %v2734 = vadd.f32 %v2733, %v2460
        %v2735 = vadd.f32 %v2734, %v2461
        %v2736 = vadd.f32 %v2735, %v2462
        %2737 = vadd.xlane.f32.xlu0 %v2736
        %v2738 = vpop.xlane.xlu0 %2737
        %v2739 = vadd.f32 %v2463, %v2464
        %v2740 = vadd.f32 %v2739, %v2465
        %v2741 = vadd.f32 %v2740, %v2466
        %v2742 = vadd.f32 %v2741, %v2467
        %v2743 = vadd.f32 %v2742, %v2468
        %v2744 = vadd.f32 %v2743, %v2469
        %v2745 = vadd.f32 %v2744, %v2470
        %2746 = vadd.xlane.f32.xlu0 %v2745
        %v2747 = vpop.xlane.xlu0 %2746
        %v2748 = vadd.f32 %v2471, %v2472
        %v2749 = vadd.f32 %v2748, %v2473
        %v2750 = vadd.f32 %v2749, %v2474
        %v2751 = vadd.f32 %v2750, %v2475
        %v2752 = vadd.f32 %v2751, %v2476
        %v2753 = vadd.f32 %v2752, %v2477
        %v2754 = vadd.f32 %v2753, %v2478
        %2755 = vadd.xlane.f32.xlu0 %v2754
        %v2756 = vpop.xlane.xlu0 %2755
        %v2757 = vadd.f32 %v2479, %v2480
        %v2758 = vadd.f32 %v2757, %v2481
        %v2759 = vadd.f32 %v2758, %v2482
        %v2760 = vadd.f32 %v2759, %v2483
        %v2761 = vadd.f32 %v2760, %v2484
        %v2762 = vadd.f32 %v2761, %v2485
        %v2763 = vadd.f32 %v2762, %v2486
        %2764 = vadd.xlane.f32.xlu0 %v2763
        %v2765 = vpop.xlane.xlu0 %2764
        %v2766 = vadd.f32 %v2487, %v2488
        %v2767 = vadd.f32 %v2766, %v2489
        %v2768 = vadd.f32 %v2767, %v2490
        %v2769 = vadd.f32 %v2768, %v2491
        %v2770 = vadd.f32 %v2769, %v2492
        %v2771 = vadd.f32 %v2770, %v2493
        %v2772 = vadd.f32 %v2771, %v2494
        %2773 = vadd.xlane.f32.xlu0 %v2772
        %v2774 = vpop.xlane.xlu0 %2773
        %v2775 = vadd.f32 %v2495, %v2496
        %v2776 = vadd.f32 %v2775, %v2497
        %v2777 = vadd.f32 %v2776, %v2498
        %v2778 = vadd.f32 %v2777, %v2499
        %v2779 = vadd.f32 %v2778, %v2500
        %v2780 = vadd.f32 %v2779, %v2501
        %v2781 = vadd.f32 %v2780, %v2502
        %2782 = vadd.xlane.f32.xlu0 %v2781
        %v2783 = vpop.xlane.xlu0 %2782
        %v2784 = vadd.f32 %v2503, %v2504
        %v2785 = vadd.f32 %v2784, %v2505
        %v2786 = vadd.f32 %v2785, %v2506
        %v2787 = vadd.f32 %v2786, %v2507
        %v2788 = vadd.f32 %v2787, %v2508
        %v2789 = vadd.f32 %v2788, %v2509
        %v2790 = vadd.f32 %v2789, %v2510
        %2791 = vadd.xlane.f32.xlu0 %v2790
        %v2792 = vpop.xlane.xlu0 %2791
        %v2793 = vadd.f32 %v2511, %v2512
        %v2794 = vadd.f32 %v2793, %v2513
        %v2795 = vadd.f32 %v2794, %v2514
        %v2796 = vadd.f32 %v2795, %v2515
        %v2797 = vadd.f32 %v2796, %v2516
        %v2798 = vadd.f32 %v2797, %v2517
        %v2799 = vadd.f32 %v2798, %v2518
        %2800 = vadd.xlane.f32.xlu0 %v2799
        %v2801 = vpop.xlane.xlu0 %2800
        %v2802 = vadd.f32 %v2519, %v2520
        %v2803 = vadd.f32 %v2802, %v2521
        %v2804 = vadd.f32 %v2803, %v2522
        %v2805 = vadd.f32 %v2804, %v2523
        %v2806 = vadd.f32 %v2805, %v2524
        %v2807 = vadd.f32 %v2806, %v2525
        %v2808 = vadd.f32 %v2807, %v2526
        %2809 = vadd.xlane.f32.xlu0 %v2808
        %v2810 = vpop.xlane.xlu0 %2809
        %v2811 = vadd.f32 %v2527, %v2528
        %v2812 = vadd.f32 %v2811, %v2529
        %v2813 = vadd.f32 %v2812, %v2530
        %v2814 = vadd.f32 %v2813, %v2531
        %v2815 = vadd.f32 %v2814, %v2532
        %v2816 = vadd.f32 %v2815, %v2533
        %v2817 = vadd.f32 %v2816, %v2534
        %2818 = vadd.xlane.f32.xlu0 %v2817
        %v2819 = vpop.xlane.xlu0 %2818
        %v2820 = vadd.f32 %v2535, %v2536
        %v2821 = vadd.f32 %v2820, %v2537
        %v2822 = vadd.f32 %v2821, %v2538
        %v2823 = vadd.f32 %v2822, %v2539
        %v2824 = vadd.f32 %v2823, %v2540
        %v2825 = vadd.f32 %v2824, %v2541
        %v2826 = vadd.f32 %v2825, %v2542
        %2827 = vadd.xlane.f32.xlu0 %v2826
        %v2828 = vpop.xlane.xlu0 %2827
        %v2829 = vadd.f32 %v2543, %v2544
        %v2830 = vadd.f32 %v2829, %v2545
        %v2831 = vadd.f32 %v2830, %v2546
        %v2832 = vadd.f32 %v2831, %v2547
        %v2833 = vadd.f32 %v2832, %v2548
        %v2834 = vadd.f32 %v2833, %v2549
        %v2835 = vadd.f32 %v2834, %v2550
        %2836 = vadd.xlane.f32.xlu0 %v2835
        %v2837 = vpop.xlane.xlu0 %2836
        %v2838 = vadd.f32 %v2551, %v2552
        %v2839 = vadd.f32 %v2838, %v2553
        %v2840 = vadd.f32 %v2839, %v2554
        %v2841 = vadd.f32 %v2840, %v2555
        %v2842 = vadd.f32 %v2841, %v2556
        %v2843 = vadd.f32 %v2842, %v2557
        %v2844 = vadd.f32 %v2843, %v2558
        %2845 = vadd.xlane.f32.xlu0 %v2844
        %v2846 = vpop.xlane.xlu0 %2845
        %v2847 = vadd.f32 %v2271, %v2567
        %v2848 = vadd.f32 %v2272, %v2576
        %v2849 = vadd.f32 %v2273, %v2585
        %v2850 = vadd.f32 %v2274, %v2594
        %v2851 = vadd.f32 %v2275, %v2603
        %v2852 = vadd.f32 %v2276, %v2612
        %v2853 = vadd.f32 %v2277, %v2621
        %v2854 = vadd.f32 %v2278, %v2630
        %v2855 = vadd.f32 %v2279, %v2639
        %v2856 = vadd.f32 %v2280, %v2648
        %v2857 = vadd.f32 %v2281, %v2657
        %v2858 = vadd.f32 %v2282, %v2666
        %v2859 = vadd.f32 %v2283, %v2675
        %v2860 = vadd.f32 %v2284, %v2684
        %v2861 = vadd.f32 %v2285, %v2693
        %v2862 = vadd.f32 %v2286, %v2702
        %v2863 = vadd.f32 %v2287, %v2711
        %v2864 = vadd.f32 %v2288, %v2720
        %v2865 = vadd.f32 %v2289, %v2729
        %v2866 = vadd.f32 %v2290, %v2738
        %v2867 = vadd.f32 %v2291, %v2747
        %v2868 = vadd.f32 %v2292, %v2756
        %v2869 = vadd.f32 %v2293, %v2765
        %v2870 = vadd.f32 %v2294, %v2774
        %v2871 = vadd.f32 %v2295, %v2783
        %v2872 = vadd.f32 %v2296, %v2792
        %v2873 = vadd.f32 %v2297, %v2801
        %v2874 = vadd.f32 %v2298, %v2810
        %v2875 = vadd.f32 %v2299, %v2819
        %v2876 = vadd.f32 %v2300, %v2828
        %v2877 = vadd.f32 %v2301, %v2837
        %v2878 = vadd.f32 %v2302, %v2846
        %vm2879 = vcmask 7168
        %2880 = vst.msk [vmem:[#allocation2] sm:$0xff] %vm2879, %v2847
        %2881 = vst.msk [vmem:[#allocation2 + $0x8] sm:$0xff] %vm2879, %v2848
        %2882 = vst.msk [vmem:[#allocation2 + $0x10] sm:$0xff] %vm2879, %v2849
        %2883 = vst.msk [vmem:[#allocation2 + $0x18] sm:$0xff] %vm2879, %v2850
        %2884 = vst.msk [vmem:[#allocation2 + $0x20] sm:$0xff] %vm2879, %v2851
        %2885 = vst.msk [vmem:[#allocation2 + $0x28] sm:$0xff] %vm2879, %v2852
        %2886 = vst.msk [vmem:[#allocation2 + $0x30] sm:$0xff] %vm2879, %v2853
        %2887 = vst.msk [vmem:[#allocation2 + $0x38] sm:$0xff] %vm2879, %v2854
        %2888 = vst.msk [vmem:[#allocation2 + $0x40] sm:$0xff] %vm2879, %v2855
        %2889 = vst.msk [vmem:[#allocation2 + $0x48] sm:$0xff] %vm2879, %v2856
        %2890 = vst.msk [vmem:[#allocation2 + $0x50] sm:$0xff] %vm2879, %v2857
        %2891 = vst.msk [vmem:[#allocation2 + $0x58] sm:$0xff] %vm2879, %v2858
        %2892 = vst.msk [vmem:[#allocation2 + $0x60] sm:$0xff] %vm2879, %v2859
        %2893 = vst.msk [vmem:[#allocation2 + $0x68] sm:$0xff] %vm2879, %v2860
        %2894 = vst.msk [vmem:[#allocation2 + $0x70] sm:$0xff] %vm2879, %v2861
        %2895 = vst.msk [vmem:[#allocation2 + $0x78] sm:$0xff] %vm2879, %v2862
        %2896 = vst.msk [vmem:[#allocation2 + $0x80] sm:$0xff] %vm2879, %v2863
        %2897 = vst.msk [vmem:[#allocation2 + $0x88] sm:$0xff] %vm2879, %v2864
        %2898 = vst.msk [vmem:[#allocation2 + $0x90] sm:$0xff] %vm2879, %v2865
        %2899 = vst.msk [vmem:[#allocation2 + $0x98] sm:$0xff] %vm2879, %v2866
        %2900 = vst.msk [vmem:[#allocation2 + $0xa0] sm:$0xff] %vm2879, %v2867
        %2901 = vst.msk [vmem:[#allocation2 + $0xa8] sm:$0xff] %vm2879, %v2868
        %2902 = vst.msk [vmem:[#allocation2 + $0xb0] sm:$0xff] %vm2879, %v2869
        %2903 = vst.msk [vmem:[#allocation2 + $0xb8] sm:$0xff] %vm2879, %v2870
        %2904 = vst.msk [vmem:[#allocation2 + $0xc0] sm:$0xff] %vm2879, %v2871
        %2905 = vst.msk [vmem:[#allocation2 + $0xc8] sm:$0xff] %vm2879, %v2872
        %2906 = vst.msk [vmem:[#allocation2 + $0xd0] sm:$0xff] %vm2879, %v2873
        %2907 = vst.msk [vmem:[#allocation2 + $0xd8] sm:$0xff] %vm2879, %v2874
        %2908 = vst.msk [vmem:[#allocation2 + $0xe0] sm:$0xff] %vm2879, %v2875
        %2909 = vst.msk [vmem:[#allocation2 + $0xe8] sm:$0xff] %vm2879, %v2876
        %2910 = vst.msk [vmem:[#allocation2 + $0xf0] sm:$0xff] %vm2879, %v2877
        %2911 = vst.msk [vmem:[#allocation2 + $0xf8] sm:$0xff] %vm2879, %v2878
        // Predicated region
        $region33: #{mean_aggregate.1} parent=27 // pred_check
          %p2912 = pneg %p177
        $region34: #{mean_aggregate.1} parent=27 // pred_check_branch
          %2914 = sbr.rel (%p2912) target = $region36
        $region35: #{mean_aggregate.1} parent=27 // pred_region
          %v2915 = vld [vmem:[#allocation2] sm:$0xff]
          %v2916 = vld [vmem:[#allocation2 + $0x8] sm:$0xff]
          %v2917 = vld [vmem:[#allocation2 + $0x10] sm:$0xff]
          %v2918 = vld [vmem:[#allocation2 + $0x18] sm:$0xff]
          %v2919 = vld [vmem:[#allocation2 + $0x20] sm:$0xff]
          %v2920 = vld [vmem:[#allocation2 + $0x28] sm:$0xff]
          %v2921 = vld [vmem:[#allocation2 + $0x30] sm:$0xff]
          %v2922 = vld [vmem:[#allocation2 + $0x38] sm:$0xff]
          %v2923 = vld [vmem:[#allocation2 + $0x40] sm:$0xff]
          %v2924 = vld [vmem:[#allocation2 + $0x48] sm:$0xff]
          %v2925 = vld [vmem:[#allocation2 + $0x50] sm:$0xff]
          %v2926 = vld [vmem:[#allocation2 + $0x58] sm:$0xff]
          %v2927 = vld [vmem:[#allocation2 + $0x60] sm:$0xff]
          %v2928 = vld [vmem:[#allocation2 + $0x68] sm:$0xff]
          %v2929 = vld [vmem:[#allocation2 + $0x70] sm:$0xff]
          %v2930 = vld [vmem:[#allocation2 + $0x78] sm:$0xff]
          %v2931 = vld [vmem:[#allocation2 + $0x80] sm:$0xff]
          %v2932 = vld [vmem:[#allocation2 + $0x88] sm:$0xff]
          %v2933 = vld [vmem:[#allocation2 + $0x90] sm:$0xff]
          %v2934 = vld [vmem:[#allocation2 + $0x98] sm:$0xff]
          %v2935 = vld [vmem:[#allocation2 + $0xa0] sm:$0xff]
          %v2936 = vld [vmem:[#allocation2 + $0xa8] sm:$0xff]
          %v2937 = vld [vmem:[#allocation2 + $0xb0] sm:$0xff]
          %v2938 = vld [vmem:[#allocation2 + $0xb8] sm:$0xff]
          %v2939 = vld [vmem:[#allocation2 + $0xc0] sm:$0xff]
          %v2940 = vld [vmem:[#allocation2 + $0xc8] sm:$0xff]
          %v2941 = vld [vmem:[#allocation2 + $0xd0] sm:$0xff]
          %v2942 = vld [vmem:[#allocation2 + $0xd8] sm:$0xff]
          %v2943 = vld [vmem:[#allocation2 + $0xe0] sm:$0xff]
          %v2944 = vld [vmem:[#allocation2 + $0xe8] sm:$0xff]
          %v2945 = vld [vmem:[#allocation2 + $0xf0] sm:$0xff]
          %v2946 = vld [vmem:[#allocation2 + $0xf8] sm:$0xff]
          %vm2947 = vcmp.gt.f32.partialorder %v2915, 0.0
          %vm2948 = vcmp.gt.f32.partialorder %v2916, 0.0
          %vm2949 = vcmp.gt.f32.partialorder %v2917, 0.0
          %vm2950 = vcmp.gt.f32.partialorder %v2918, 0.0
          %vm2951 = vcmp.gt.f32.partialorder %v2919, 0.0
          %vm2952 = vcmp.gt.f32.partialorder %v2920, 0.0
          %vm2953 = vcmp.gt.f32.partialorder %v2921, 0.0
          %vm2954 = vcmp.gt.f32.partialorder %v2922, 0.0
          %vm2955 = vcmp.gt.f32.partialorder %v2923, 0.0
          %vm2956 = vcmp.gt.f32.partialorder %v2924, 0.0
          %vm2957 = vcmp.gt.f32.partialorder %v2925, 0.0
          %vm2958 = vcmp.gt.f32.partialorder %v2926, 0.0
          %vm2959 = vcmp.gt.f32.partialorder %v2927, 0.0
          %vm2960 = vcmp.gt.f32.partialorder %v2928, 0.0
          %vm2961 = vcmp.gt.f32.partialorder %v2929, 0.0
          %vm2962 = vcmp.gt.f32.partialorder %v2930, 0.0
          %vm2963 = vcmp.gt.f32.partialorder %v2931, 0.0
          %vm2964 = vcmp.gt.f32.partialorder %v2932, 0.0
          %vm2965 = vcmp.gt.f32.partialorder %v2933, 0.0
          %vm2966 = vcmp.gt.f32.partialorder %v2934, 0.0
          %vm2967 = vcmp.gt.f32.partialorder %v2935, 0.0
          %vm2968 = vcmp.gt.f32.partialorder %v2936, 0.0
          %vm2969 = vcmp.gt.f32.partialorder %v2937, 0.0
          %vm2970 = vcmp.gt.f32.partialorder %v2938, 0.0
          %vm2971 = vcmp.gt.f32.partialorder %v2939, 0.0
          %vm2972 = vcmp.gt.f32.partialorder %v2940, 0.0
          %vm2973 = vcmp.gt.f32.partialorder %v2941, 0.0
          %vm2974 = vcmp.gt.f32.partialorder %v2942, 0.0
          %vm2975 = vcmp.gt.f32.partialorder %v2943, 0.0
          %vm2976 = vcmp.gt.f32.partialorder %v2944, 0.0
          %vm2977 = vcmp.gt.f32.partialorder %v2945, 0.0
          %vm2978 = vcmp.gt.f32.partialorder %v2946, 0.0
          %v2979 = vsel %vm2947, %v2915, 1.0
          %v2980 = vsel %vm2948, %v2916, 1.0
          %v2981 = vsel %vm2949, %v2917, 1.0
          %v2982 = vsel %vm2950, %v2918, 1.0
          %v2983 = vsel %vm2951, %v2919, 1.0
          %v2984 = vsel %vm2952, %v2920, 1.0
          %v2985 = vsel %vm2953, %v2921, 1.0
          %v2986 = vsel %vm2954, %v2922, 1.0
          %v2987 = vsel %vm2955, %v2923, 1.0
          %v2988 = vsel %vm2956, %v2924, 1.0
          %v2989 = vsel %vm2957, %v2925, 1.0
          %v2990 = vsel %vm2958, %v2926, 1.0
          %v2991 = vsel %vm2959, %v2927, 1.0
          %v2992 = vsel %vm2960, %v2928, 1.0
          %v2993 = vsel %vm2961, %v2929, 1.0
          %v2994 = vsel %vm2962, %v2930, 1.0
          %v2995 = vsel %vm2963, %v2931, 1.0
          %v2996 = vsel %vm2964, %v2932, 1.0
          %v2997 = vsel %vm2965, %v2933, 1.0
          %v2998 = vsel %vm2966, %v2934, 1.0
          %v2999 = vsel %vm2967, %v2935, 1.0
          %v3000 = vsel %vm2968, %v2936, 1.0
          %v3001 = vsel %vm2969, %v2937, 1.0
          %v3002 = vsel %vm2970, %v2938, 1.0
          %v3003 = vsel %vm2971, %v2939, 1.0
          %v3004 = vsel %vm2972, %v2940, 1.0
          %v3005 = vsel %vm2973, %v2941, 1.0
          %v3006 = vsel %vm2974, %v2942, 1.0
          %v3007 = vsel %vm2975, %v2943, 1.0
          %v3008 = vsel %vm2976, %v2944, 1.0
          %v3009 = vsel %vm2977, %v2945, 1.0
          %v3010 = vsel %vm2978, %v2946, 1.0
          %v3011 = vrcp.pop %v2979
          %v3012 = vrcp.pop %v2980
          %v3013 = vrcp.pop %v2981
          %v3014 = vrcp.pop %v2982
          %v3015 = vrcp.pop %v2983
          %v3016 = vrcp.pop %v2984
          %v3017 = vrcp.pop %v2985
          %v3018 = vrcp.pop %v2986
          %v3019 = vrcp.pop %v2987
          %v3020 = vrcp.pop %v2988
          %v3021 = vrcp.pop %v2989
          %v3022 = vrcp.pop %v2990
          %v3023 = vrcp.pop %v2991
          %v3024 = vrcp.pop %v2992
          %v3025 = vrcp.pop %v2993
          %v3026 = vrcp.pop %v2994
          %v3027 = vrcp.pop %v2995
          %v3028 = vrcp.pop %v2996
          %v3029 = vrcp.pop %v2997
          %v3030 = vrcp.pop %v2998
          %v3031 = vrcp.pop %v2999
          %v3032 = vrcp.pop %v3000
          %v3033 = vrcp.pop %v3001
          %v3034 = vrcp.pop %v3002
          %v3035 = vrcp.pop %v3003
          %v3036 = vrcp.pop %v3004
          %v3037 = vrcp.pop %v3005
          %v3038 = vrcp.pop %v3006
          %v3039 = vrcp.pop %v3007
          %v3040 = vrcp.pop %v3008
          %v3041 = vrcp.pop %v3009
          %v3042 = vrcp.pop %v3010
          %v3043 = vld [vmem:[%s162] sm:$0xff]
          %v3044 = vld [vmem:[%s162 + $0x8] sm:$0xff]
          %v3045 = vld [vmem:[%s162 + $0x10] sm:$0xff]
          %v3046 = vld [vmem:[%s162 + $0x18] sm:$0xff]
          %v3047 = vld [vmem:[%s162 + $0x20] sm:$0xff]
          %v3048 = vld [vmem:[%s162 + $0x28] sm:$0xff]
          %v3049 = vld [vmem:[%s162 + $0x30] sm:$0xff]
          %v3050 = vld [vmem:[%s162 + $0x38] sm:$0xff]
          %v3051 = vld [vmem:[%s162 + $0x40] sm:$0xff]
          %v3052 = vld [vmem:[%s162 + $0x48] sm:$0xff]
          %v3053 = vld [vmem:[%s162 + $0x50] sm:$0xff]
          %v3054 = vld [vmem:[%s162 + $0x58] sm:$0xff]
          %v3055 = vld [vmem:[%s162 + $0x60] sm:$0xff]
          %v3056 = vld [vmem:[%s162 + $0x68] sm:$0xff]
          %v3057 = vld [vmem:[%s162 + $0x70] sm:$0xff]
          %v3058 = vld [vmem:[%s162 + $0x78] sm:$0xff]
          %v3059 = vld [vmem:[%s162 + $0x80] sm:$0xff]
          %v3060 = vld [vmem:[%s162 + $0x88] sm:$0xff]
          %v3061 = vld [vmem:[%s162 + $0x90] sm:$0xff]
          %v3062 = vld [vmem:[%s162 + $0x98] sm:$0xff]
          %v3063 = vld [vmem:[%s162 + $0xa0] sm:$0xff]
          %v3064 = vld [vmem:[%s162 + $0xa8] sm:$0xff]
          %v3065 = vld [vmem:[%s162 + $0xb0] sm:$0xff]
          %v3066 = vld [vmem:[%s162 + $0xb8] sm:$0xff]
          %v3067 = vld [vmem:[%s162 + $0xc0] sm:$0xff]
          %v3068 = vld [vmem:[%s162 + $0xc8] sm:$0xff]
          %v3069 = vld [vmem:[%s162 + $0xd0] sm:$0xff]
          %v3070 = vld [vmem:[%s162 + $0xd8] sm:$0xff]
          %v3071 = vld [vmem:[%s162 + $0xe0] sm:$0xff]
          %v3072 = vld [vmem:[%s162 + $0xe8] sm:$0xff]
          %v3073 = vld [vmem:[%s162 + $0xf0] sm:$0xff]
          %v3074 = vld [vmem:[%s162 + $0xf8] sm:$0xff]
          %3076 = vset.pattern.permute.xlu0 0
          %3077 = vperm.xlu0 %3076, %v3011
          %v3078 = vpop.permute.xlu0 %3077
          %3081 = vset.pattern.permute.xlu0 0
          %3082 = vperm.xlu0 %3081, %v3012
          %v3083 = vpop.permute.xlu0 %3082
          %3086 = vset.pattern.permute.xlu0 0
          %3087 = vperm.xlu0 %3086, %v3013
          %v3088 = vpop.permute.xlu0 %3087
          %3091 = vset.pattern.permute.xlu0 0
          %3092 = vperm.xlu0 %3091, %v3014
          %v3093 = vpop.permute.xlu0 %3092
          %3096 = vset.pattern.permute.xlu0 0
          %3097 = vperm.xlu0 %3096, %v3015
          %v3098 = vpop.permute.xlu0 %3097
          %3101 = vset.pattern.permute.xlu0 0
          %3102 = vperm.xlu0 %3101, %v3016
          %v3103 = vpop.permute.xlu0 %3102
          %3106 = vset.pattern.permute.xlu0 0
          %3107 = vperm.xlu0 %3106, %v3017
          %v3108 = vpop.permute.xlu0 %3107
          %3111 = vset.pattern.permute.xlu0 0
          %3112 = vperm.xlu0 %3111, %v3018
          %v3113 = vpop.permute.xlu0 %3112
          %3116 = vset.pattern.permute.xlu0 0
          %3117 = vperm.xlu0 %3116, %v3019
          %v3118 = vpop.permute.xlu0 %3117
          %3121 = vset.pattern.permute.xlu0 0
          %3122 = vperm.xlu0 %3121, %v3020
          %v3123 = vpop.permute.xlu0 %3122
          %3126 = vset.pattern.permute.xlu0 0
          %3127 = vperm.xlu0 %3126, %v3021
          %v3128 = vpop.permute.xlu0 %3127
          %3131 = vset.pattern.permute.xlu0 0
          %3132 = vperm.xlu0 %3131, %v3022
          %v3133 = vpop.permute.xlu0 %3132
          %3136 = vset.pattern.permute.xlu0 0
          %3137 = vperm.xlu0 %3136, %v3023
          %v3138 = vpop.permute.xlu0 %3137
          %3141 = vset.pattern.permute.xlu0 0
          %3142 = vperm.xlu0 %3141, %v3024
          %v3143 = vpop.permute.xlu0 %3142
          %3146 = vset.pattern.permute.xlu0 0
          %3147 = vperm.xlu0 %3146, %v3025
          %v3148 = vpop.permute.xlu0 %3147
          %3151 = vset.pattern.permute.xlu0 0
          %3152 = vperm.xlu0 %3151, %v3026
          %v3153 = vpop.permute.xlu0 %3152
          %3156 = vset.pattern.permute.xlu0 0
          %3157 = vperm.xlu0 %3156, %v3027
          %v3158 = vpop.permute.xlu0 %3157
          %3161 = vset.pattern.permute.xlu0 0
          %3162 = vperm.xlu0 %3161, %v3028
          %v3163 = vpop.permute.xlu0 %3162
          %3166 = vset.pattern.permute.xlu0 0
          %3167 = vperm.xlu0 %3166, %v3029
          %v3168 = vpop.permute.xlu0 %3167
          %3171 = vset.pattern.permute.xlu0 0
          %3172 = vperm.xlu0 %3171, %v3030
          %v3173 = vpop.permute.xlu0 %3172
          %3176 = vset.pattern.permute.xlu0 0
          %3177 = vperm.xlu0 %3176, %v3031
          %v3178 = vpop.permute.xlu0 %3177
          %3181 = vset.pattern.permute.xlu0 0
          %3182 = vperm.xlu0 %3181, %v3032
          %v3183 = vpop.permute.xlu0 %3182
          %3186 = vset.pattern.permute.xlu0 0
          %3187 = vperm.xlu0 %3186, %v3033
          %v3188 = vpop.permute.xlu0 %3187
          %3191 = vset.pattern.permute.xlu0 0
          %3192 = vperm.xlu0 %3191, %v3034
          %v3193 = vpop.permute.xlu0 %3192
          %3196 = vset.pattern.permute.xlu0 0
          %3197 = vperm.xlu0 %3196, %v3035
          %v3198 = vpop.permute.xlu0 %3197
          %3201 = vset.pattern.permute.xlu0 0
          %3202 = vperm.xlu0 %3201, %v3036
          %v3203 = vpop.permute.xlu0 %3202
          %3206 = vset.pattern.permute.xlu0 0
          %3207 = vperm.xlu0 %3206, %v3037
          %v3208 = vpop.permute.xlu0 %3207
          %3211 = vset.pattern.permute.xlu0 0
          %3212 = vperm.xlu0 %3211, %v3038
          %v3213 = vpop.permute.xlu0 %3212
          %3216 = vset.pattern.permute.xlu0 0
          %3217 = vperm.xlu0 %3216, %v3039
          %v3218 = vpop.permute.xlu0 %3217
          %3221 = vset.pattern.permute.xlu0 0
          %3222 = vperm.xlu0 %3221, %v3040
          %v3223 = vpop.permute.xlu0 %3222
          %3226 = vset.pattern.permute.xlu0 0
          %3227 = vperm.xlu0 %3226, %v3041
          %v3228 = vpop.permute.xlu0 %3227
          %3231 = vset.pattern.permute.xlu0 0
          %3232 = vperm.xlu0 %3231, %v3042
          %v3233 = vpop.permute.xlu0 %3232
          %v3235 = vmul.f32 %v3043, %v3078
          %v3236 = vmul.f32 %v3044, %v3083
          %v3237 = vmul.f32 %v3045, %v3088
          %v3238 = vmul.f32 %v3046, %v3093
          %v3239 = vmul.f32 %v3047, %v3098
          %v3240 = vmul.f32 %v3048, %v3103
          %v3241 = vmul.f32 %v3049, %v3108
          %v3242 = vmul.f32 %v3050, %v3113
          %v3243 = vmul.f32 %v3051, %v3118
          %v3244 = vmul.f32 %v3052, %v3123
          %v3245 = vmul.f32 %v3053, %v3128
          %v3246 = vmul.f32 %v3054, %v3133
          %v3247 = vmul.f32 %v3055, %v3138
          %v3248 = vmul.f32 %v3056, %v3143
          %v3249 = vmul.f32 %v3057, %v3148
          %v3250 = vmul.f32 %v3058, %v3153
          %v3251 = vmul.f32 %v3059, %v3158
          %v3252 = vmul.f32 %v3060, %v3163
          %v3253 = vmul.f32 %v3061, %v3168
          %v3254 = vmul.f32 %v3062, %v3173
          %v3255 = vmul.f32 %v3063, %v3178
          %v3256 = vmul.f32 %v3064, %v3183
          %v3257 = vmul.f32 %v3065, %v3188
          %v3258 = vmul.f32 %v3066, %v3193
          %v3259 = vmul.f32 %v3067, %v3198
          %v3260 = vmul.f32 %v3068, %v3203
          %v3261 = vmul.f32 %v3069, %v3208
          %v3262 = vmul.f32 %v3070, %v3213
          %v3263 = vmul.f32 %v3071, %v3218
          %v3264 = vmul.f32 %v3072, %v3223
          %v3265 = vmul.f32 %v3073, %v3228
          %v3266 = vmul.f32 %v3074, %v3233
          %3267 = vst [vmem:[%s162] sm:$0xff] %v3235
          %3268 = vst [vmem:[%s162 + $0x8] sm:$0xff] %v3236
          %3269 = vst [vmem:[%s162 + $0x10] sm:$0xff] %v3237
          %3270 = vst [vmem:[%s162 + $0x18] sm:$0xff] %v3238
          %3271 = vst [vmem:[%s162 + $0x20] sm:$0xff] %v3239
          %3272 = vst [vmem:[%s162 + $0x28] sm:$0xff] %v3240
          %3273 = vst [vmem:[%s162 + $0x30] sm:$0xff] %v3241
          %3274 = vst [vmem:[%s162 + $0x38] sm:$0xff] %v3242
          %3275 = vst [vmem:[%s162 + $0x40] sm:$0xff] %v3243
          %3276 = vst [vmem:[%s162 + $0x48] sm:$0xff] %v3244
          %3277 = vst [vmem:[%s162 + $0x50] sm:$0xff] %v3245
          %3278 = vst [vmem:[%s162 + $0x58] sm:$0xff] %v3246
          %3279 = vst [vmem:[%s162 + $0x60] sm:$0xff] %v3247
          %3280 = vst [vmem:[%s162 + $0x68] sm:$0xff] %v3248
          %3281 = vst [vmem:[%s162 + $0x70] sm:$0xff] %v3249
          %3282 = vst [vmem:[%s162 + $0x78] sm:$0xff] %v3250
          %3283 = vst [vmem:[%s162 + $0x80] sm:$0xff] %v3251
          %3284 = vst [vmem:[%s162 + $0x88] sm:$0xff] %v3252
          %3285 = vst [vmem:[%s162 + $0x90] sm:$0xff] %v3253
          %3286 = vst [vmem:[%s162 + $0x98] sm:$0xff] %v3254
          %3287 = vst [vmem:[%s162 + $0xa0] sm:$0xff] %v3255
          %3288 = vst [vmem:[%s162 + $0xa8] sm:$0xff] %v3256
          %3289 = vst [vmem:[%s162 + $0xb0] sm:$0xff] %v3257
          %3290 = vst [vmem:[%s162 + $0xb8] sm:$0xff] %v3258
          %3291 = vst [vmem:[%s162 + $0xc0] sm:$0xff] %v3259
          %3292 = vst [vmem:[%s162 + $0xc8] sm:$0xff] %v3260
          %3293 = vst [vmem:[%s162 + $0xd0] sm:$0xff] %v3261
          %3294 = vst [vmem:[%s162 + $0xd8] sm:$0xff] %v3262
          %3295 = vst [vmem:[%s162 + $0xe0] sm:$0xff] %v3263
          %3296 = vst [vmem:[%s162 + $0xe8] sm:$0xff] %v3264
          %3297 = vst [vmem:[%s162 + $0xf0] sm:$0xff] %v3265
          %3298 = vst [vmem:[%s162 + $0xf8] sm:$0xff] %v3266
        $region36: #{mean_aggregate.1} parent=27 // pred_fallthru
          _
        %s3299 = sand.u32 %s85, 1
        %s3300 = scalar_lea.sflag [#allocation4], %s3299
        %s3301 = sand.u32 %s85, 1
        %s3302 = smul.addr %s3301, 256
        %s3303 = scalar_lea.vmem [#allocation3], %s3302
        // Predicated region
        $region37: #{mean_aggregate.1} parent=27 // pred_check
          %p3304 = pneg %p95
        $region38: #{mean_aggregate.1} parent=27 // pred_check_branch
          %3306 = sbr.rel (%p3304) target = $region40
        $region39: #{mean_aggregate.1} parent=27 // pred_region
          %s3307 = smul.u32 32, %s20
          %s3309 = ssub.s32 4096, 4096
          %3310 = vsyncadd %s3300, %s3309
          %s3311 = smul.addr %s3307, 128
          %s3312 = scalar_lea.hbm %s2, %s3311
          %s3313 = sshll.u32 %s3303, 4
          %s3314 = int_to_ptr.vmem [resolvable:$true] %s3313
          %3319 = dma.vmem_to_hbm [thread:$0]  %s3314, 4096, %s3312, %s3300, 128, 128, 8
        $region40: #{mean_aggregate.1} parent=27 // pred_fallthru
          _
      $region28: #{mean_aggregate.1} parent=5 // pred_fallthru
        _
      %p3320 = scmp.le.s32.totalorder 2, %s11
      // Predicated region
      $region41: #{mean_aggregate.1} parent=5 // pred_check
        %p3321 = pneg %p3320
      $region42: #{mean_aggregate.1} parent=5 // pred_check_branch
        %3323 = sbr.rel (%p3321) target = $region44
      $region43: #{mean_aggregate.1} parent=5 // pred_region
        %s3324 = ssub.s32 %s11, 2
        // Predicated region
        $region45: #{mean_aggregate.1} parent=43 // pred_check
          %p3325 = pneg %p101
        $region46: #{mean_aggregate.1} parent=43 // pred_check_branch
          %3327 = sbr.rel (%p3325) target = $region48
        $region47: #{mean_aggregate.1} parent=43 // pred_region
          %s3328 = sand.u32 %s86, 1
          %s3329 = scalar_lea.sflag [#allocation4], %s3328
          %s3330 = sand.u32 %s86, 1
          %s3331 = smul.addr %s3330, 256
          %s3332 = scalar_lea.vmem [#allocation3], %s3331
          %3333 = dma.done %s3329, 4096
        $region48: #{mean_aggregate.1} parent=43 // pred_fallthru
          _
      $region44: #{mean_aggregate.1} parent=5 // pred_fallthru
        _
    $region6: #{mean_aggregate.1} parent=1 // loop_footer
      %s15 = sadd.s32 1, %s11
    $region7: #{mean_aggregate.1} parent=1 // loop_footer_branch
      %10 = sbr.rel target = $region3
    $region8: #{mean_aggregate.1} parent=1 // loop_exit
      _
    %3334 = vsyncpa [#allocation4], 1
    %s3335 = scalar_lea.sflag [#allocation4], 1
    %3336 = vsyncpa %s3335, 1

</llo_original>
